<compile_context>
chip_gen: v5e
topology: v5e:2x2
jax: 0.10.0
libtpu: 0.0.40
codegen_flags: <defaults>
</compile_context>

<pallas_src>
import functools

import jax
import jax.numpy as jnp
from jax.experimental import pallas as pl
from jax.experimental.pallas import tpu as pltpu  # noqa: F401  (TPU backend)


def _bn_relu_kernel(eps, inv_m, x_ref, gamma_ref, beta_ref, o_ref):
    # x_ref: (C, M) slab — channels on sublanes, N*H*W on lanes.
    x = x_ref[...].astype(jnp.float32)

    # One-pass per-channel stats (lane-axis reduce on the XLU).
    s = jnp.sum(x, axis=1, keepdims=True)        # (C, 1)
    ss = jnp.sum(x * x, axis=1, keepdims=True)   # (C, 1)

    mean = s * inv_m                              # (C, 1)
    var = jnp.maximum(ss * inv_m - mean * mean, 0.0)   # biased var, clamped
    inv_std = jax.lax.rsqrt(var + eps)            # EUP, per-channel only

    scale = gamma_ref[...].astype(jnp.float32) * inv_std   # (C, 1)
    shift = beta_ref[...].astype(jnp.float32) - mean * scale

    # Hot pass: re-read the resident VMEM tile (reloads are cheap) so the
    # stats-pass value does not stay live across both passes.
    y = x_ref[...].astype(jnp.float32) * scale + shift
    o_ref[...] = jnp.maximum(y, 0.0).astype(o_ref.dtype)


def batchnorm2d_relu(x_nchw, gamma, beta, eps=1e-5):
    N, C, H, W = x_nchw.shape
    HW = H * W
    M = N * HW
    inv_m = 1.0 / float(M)

    if N == 1:
        x2d = x_nchw.reshape(C, HW)   # free view: channels -> sublane axis
    else:
        # TODO(synk): N>1 requires a transpose to keep channels on sublanes.
        x2d = jnp.transpose(x_nchw, (1, 0, 2, 3)).reshape(C, M)

    g = gamma.reshape(C, 1).astype(jnp.float32)
    b = beta.reshape(C, 1).astype(jnp.float32)

    kernel = functools.partial(_bn_relu_kernel, float(eps), inv_m)

    # Single invocation, whole slab in VMEM (in + out ~0.7 MB << VMEM limits).
    out2d = pl.pallas_call(
        kernel,
        out_shape=jax.ShapeDtypeStruct((C, M), x_nchw.dtype),
    )(x2d, g, b)

    if N == 1:
        return out2d.reshape(N, C, H, W)
    return jnp.transpose(out2d.reshape(C, N, H, W), (1, 0, 2, 3))


def _reference(x_nchw, gamma, beta, eps=1e-5):
    # pure-JAX reference of PyTorch training-mode BatchNorm2d + ReLU
    mean = jnp.mean(x_nchw, axis=(0, 2, 3), keepdims=True)
    var = jnp.mean((x_nchw - mean) ** 2, axis=(0, 2, 3), keepdims=True)
    y = (x_nchw - mean) * jax.lax.rsqrt(var + eps)
    y = y * gamma.reshape(1, -1, 1, 1) + beta.reshape(1, -1, 1, 1)
    return jnp.maximum(y, 0.0)


if __name__ == "__main__":
    key = jax.random.PRNGKey(0)
    kx, kg, kb = jax.random.split(key, 3)

    N, C, H, W = 1, 432, 14, 14   # shapes from the module spec (x190)
    x = jax.random.normal(kx, (N, C, H, W), dtype=jnp.float32)
    gamma = 1.0 + 0.1 * jax.random.normal(kg, (C,), dtype=jnp.float32)
    beta = 0.1 * jax.random.normal(kb, (C,), dtype=jnp.float32)

    out = batchnorm2d_relu(x, gamma, beta)
    out = jax.block_until_ready(out)

    ref = _reference(x, gamma, beta)
    assert out.shape == (N, C, H, W)
    assert jnp.allclose(out, ref, atol=1e-4, rtol=1e-4), "mismatch vs reference"

    print("KERNEL_OK")
</pallas_src>

<mosaic_0001>
module attributes {stable_mosaic.version = 11 : i64} {
  func.func @_bn_relu_kernel(%arg0: memref<432x196xf32, #tpu.memory_space<vmem>>, %arg1: memref<432x1xf32, #tpu.memory_space<vmem>>, %arg2: memref<432x1xf32, #tpu.memory_space<vmem>>, %arg3: memref<432x196xf32, #tpu.memory_space<vmem>>) attributes {dimension_semantics = [], scalar_prefetch = 0 : i64, scratch_operands = 0 : i64, tpu.core_type = #tpu.core_type<tc>} {
    %c0 = arith.constant 0 : index
    %c0_0 = arith.constant 0 : index
    %0 = vector.load %arg0[%c0, %c0_0] : memref<432x196xf32, #tpu.memory_space<vmem>>, vector<432x196xf32>
    %cst = arith.constant dense<0.000000e+00> : vector<432xf32>
    %1 = vector.multi_reduction <add>, %0, %cst [1] : vector<432x196xf32> to vector<432xf32>
    %2 = vector.shape_cast %1 : vector<432xf32> to vector<432x1xf32>
    %3 = arith.mulf %0, %0 : vector<432x196xf32>
    %cst_1 = arith.constant dense<0.000000e+00> : vector<432xf32>
    %4 = vector.multi_reduction <add>, %3, %cst_1 [1] : vector<432x196xf32> to vector<432xf32>
    %5 = vector.shape_cast %4 : vector<432xf32> to vector<432x1xf32>
    %cst_2 = arith.constant 0.00510204071 : f32
    %6 = vector.broadcast %cst_2 : f32 to vector<432x1xf32>
    %7 = arith.mulf %2, %6 : vector<432x1xf32>
    %cst_3 = arith.constant 0.00510204071 : f32
    %8 = vector.broadcast %cst_3 : f32 to vector<432x1xf32>
    %9 = arith.mulf %5, %8 : vector<432x1xf32>
    %10 = arith.mulf %7, %7 : vector<432x1xf32>
    %11 = arith.subf %9, %10 : vector<432x1xf32>
    %cst_4 = arith.constant 0.000000e+00 : f32
    %12 = vector.broadcast %cst_4 : f32 to vector<432x1xf32>
    %13 = arith.maximumf %11, %12 : vector<432x1xf32>
    %cst_5 = arith.constant 9.99999974E-6 : f32
    %14 = vector.broadcast %cst_5 : f32 to vector<432x1xf32>
    %15 = arith.addf %13, %14 : vector<432x1xf32>
    %16 = math.rsqrt %15 : vector<432x1xf32>
    %c0_6 = arith.constant 0 : index
    %c0_7 = arith.constant 0 : index
    %17 = vector.load %arg1[%c0_6, %c0_7] : memref<432x1xf32, #tpu.memory_space<vmem>>, vector<432x1xf32>
    %18 = arith.mulf %17, %16 : vector<432x1xf32>
    %c0_8 = arith.constant 0 : index
    %c0_9 = arith.constant 0 : index
    %19 = vector.load %arg2[%c0_8, %c0_9] : memref<432x1xf32, #tpu.memory_space<vmem>>, vector<432x1xf32>
    %20 = arith.mulf %7, %18 : vector<432x1xf32>
    %21 = arith.subf %19, %20 : vector<432x1xf32>
    %c0_10 = arith.constant 0 : index
    %c0_11 = arith.constant 0 : index
    %22 = vector.load %arg0[%c0_10, %c0_11] : memref<432x196xf32, #tpu.memory_space<vmem>>, vector<432x196xf32>
    %23 = vector.broadcast %18 : vector<432x1xf32> to vector<432x196xf32>
    %24 = arith.mulf %22, %23 : vector<432x196xf32>
    %25 = vector.broadcast %21 : vector<432x1xf32> to vector<432x196xf32>
    %26 = arith.addf %24, %25 : vector<432x196xf32>
    %cst_12 = arith.constant 0.000000e+00 : f32
    %27 = vector.broadcast %cst_12 : f32 to vector<432x196xf32>
    %28 = arith.maximumf %26, %27 : vector<432x196xf32>
    %c0_13 = arith.constant 0 : index
    %c0_14 = arith.constant 0 : index
    %29 = vector.load %arg3[%c0_13, %c0_14] : memref<432x196xf32, #tpu.memory_space<vmem>>, vector<432x196xf32>
    tpu.vector_store %arg3[%c0_13, %c0_14], %28 {strides = array<i32>} : memref<432x196xf32, #tpu.memory_space<vmem>>, vector<432x196xf32>,
    return
  }
}

</mosaic_0001>

<llo_original>
// kernel: tpu_custom_call.1
$region0: #{tpu_custom_call.1}
  #allocation0 [shape = 'u32[]', space=smem, size = 0x4, offset = 0x4, fixed_abs, tag = 'smem constant byte address 0x4 - core index']
  #allocation1 [shape = 'u32[72,128]{1,0:T(1,128)}', space=vmem, size = 0x9000, scoped, tag = 'internal scratch']
  %s0 = inlined_call_operand.vmem [shape: f32[432,196], index: 0, kind: input, shape index: {}]
  %s1 = inlined_call_operand.vmem [shape: f32[432,1], index: 1, kind: input, shape index: {}]
  %s2 = inlined_call_operand.vmem [shape: f32[432,1], index: 2, kind: input, shape index: {}]
  %s3 = inlined_call_operand.vmem [shape: f32[432,196], index: 3, kind: output, shape index: {}]
  %s4 = sld [smem:[#allocation0]]
  $region22: #{tpu_custom_call.1} parent=0
    _
  %s6 = ssub.s32 1, %s4
  %s7 = scalar_select 0, %s6, %s4
  // Predicated region
  $region2: #{tpu_custom_call.1} parent=0 // pred_check
    _
  $region3: #{tpu_custom_call.1} parent=0 // pred_check_branch
    %9 = sbr.rel (0) target = $region5
  $region4: #{tpu_custom_call.1} parent=0 // pred_region
    _
  $region5: #{tpu_custom_call.1} parent=0 // pred_fallthru
    _
  // Predicated region
  $region6: #{tpu_custom_call.1} parent=0 // pred_check
    _
  $region7: #{tpu_custom_call.1} parent=0 // pred_check_branch
    %11 = sbr.rel (0) target = $region9
  $region8: #{tpu_custom_call.1} parent=0 // pred_region
    _
  $region9: #{tpu_custom_call.1} parent=0 // pred_fallthru
    _
  // Predicated region
  $region10: #{tpu_custom_call.1} parent=0 // pred_check
    _
  $region11: #{tpu_custom_call.1} parent=0 // pred_check_branch
    %13 = sbr.rel (0) target = $region13
  $region12: #{tpu_custom_call.1} parent=0 // pred_region
    _
  $region13: #{tpu_custom_call.1} parent=0 // pred_fallthru
    _
  %v14 = vld [vmem:[%s0] sm:$0xff]
  %v15 = vld [vmem:[%s0 + $0x8] sm:$0xff]
  %v16 = vld [vmem:[%s0 + $0x10] sm:$0xff]
  %v17 = vld [vmem:[%s0 + $0x18] sm:$0xff]
  %v18 = vld [vmem:[%s0 + $0x20] sm:$0xff]
  %v19 = vld [vmem:[%s0 + $0x28] sm:$0xff]
  %v20 = vld [vmem:[%s0 + $0x30] sm:$0xff]
  %v21 = vld [vmem:[%s0 + $0x38] sm:$0xff]
  %v22 = vld [vmem:[%s0 + $0x40] sm:$0xff]
  %v23 = vld [vmem:[%s0 + $0x48] sm:$0xff]
  %v24 = vld [vmem:[%s0 + $0x50] sm:$0xff]
  %v25 = vld [vmem:[%s0 + $0x58] sm:$0xff]
  %v26 = vld [vmem:[%s0 + $0x60] sm:$0xff]
  %v27 = vld [vmem:[%s0 + $0x68] sm:$0xff]
  %v28 = vld [vmem:[%s0 + $0x70] sm:$0xff]
  %v29 = vld [vmem:[%s0 + $0x78] sm:$0xff]
  %v30 = vld [vmem:[%s0 + $0x80] sm:$0xff]
  %v31 = vld [vmem:[%s0 + $0x88] sm:$0xff]
  %v32 = vld [vmem:[%s0 + $0x90] sm:$0xff]
  %v33 = vld [vmem:[%s0 + $0x98] sm:$0xff]
  %v34 = vld [vmem:[%s0 + $0xa0] sm:$0xff]
  %v35 = vld [vmem:[%s0 + $0xa8] sm:$0xff]
  %v36 = vld [vmem:[%s0 + $0xb0] sm:$0xff]
  %v37 = vld [vmem:[%s0 + $0xb8] sm:$0xff]
  %v38 = vld [vmem:[%s0 + $0xc0] sm:$0xff]
  %v39 = vld [vmem:[%s0 + $0xc8] sm:$0xff]
  %v40 = vld [vmem:[%s0 + $0xd0] sm:$0xff]
  %v41 = vld [vmem:[%s0 + $0xd8] sm:$0xff]
  %v42 = vld [vmem:[%s0 + $0xe0] sm:$0xff]
  %v43 = vld [vmem:[%s0 + $0xe8] sm:$0xff]
  %v44 = vld [vmem:[%s0 + $0xf0] sm:$0xff]
  %v45 = vld [vmem:[%s0 + $0xf8] sm:$0xff]
  %v46 = vld [vmem:[%s0 + $0x100] sm:$0xff]
  %v47 = vld [vmem:[%s0 + $0x108] sm:$0xff]
  %v48 = vld [vmem:[%s0 + $0x110] sm:$0xff]
  %v49 = vld [vmem:[%s0 + $0x118] sm:$0xff]
  %v50 = vld [vmem:[%s0 + $0x120] sm:$0xff]
  %v51 = vld [vmem:[%s0 + $0x128] sm:$0xff]
  %v52 = vld [vmem:[%s0 + $0x130] sm:$0xff]
  %v53 = vld [vmem:[%s0 + $0x138] sm:$0xff]
  %v54 = vld [vmem:[%s0 + $0x140] sm:$0xff]
  %v55 = vld [vmem:[%s0 + $0x148] sm:$0xff]
  %v56 = vld [vmem:[%s0 + $0x150] sm:$0xff]
  %v57 = vld [vmem:[%s0 + $0x158] sm:$0xff]
  %v58 = vld [vmem:[%s0 + $0x160] sm:$0xff]
  %v59 = vld [vmem:[%s0 + $0x168] sm:$0xff]
  %v60 = vld [vmem:[%s0 + $0x170] sm:$0xff]
  %v61 = vld [vmem:[%s0 + $0x178] sm:$0xff]
  %v62 = vld [vmem:[%s0 + $0x180] sm:$0xff]
  %v63 = vld [vmem:[%s0 + $0x188] sm:$0xff]
  %v64 = vld [vmem:[%s0 + $0x190] sm:$0xff]
  %v65 = vld [vmem:[%s0 + $0x198] sm:$0xff]
  %v66 = vld [vmem:[%s0 + $0x1a0] sm:$0xff]
  %v67 = vld [vmem:[%s0 + $0x1a8] sm:$0xff]
  %v68 = vld [vmem:[%s0 + $0x1b0] sm:$0xff]
  %v69 = vld [vmem:[%s0 + $0x1b8] sm:$0xff]
  %v70 = vld [vmem:[%s0 + $0x1c0] sm:$0xff]
  %v71 = vld [vmem:[%s0 + $0x1c8] sm:$0xff]
  %v72 = vld [vmem:[%s0 + $0x1d0] sm:$0xff]
  %v73 = vld [vmem:[%s0 + $0x1d8] sm:$0xff]
  %v74 = vld [vmem:[%s0 + $0x1e0] sm:$0xff]
  %v75 = vld [vmem:[%s0 + $0x1e8] sm:$0xff]
  %v76 = vld [vmem:[%s0 + $0x1f0] sm:$0xff]
  %v77 = vld [vmem:[%s0 + $0x1f8] sm:$0xff]
  %v78 = vld [vmem:[%s0 + $0x200] sm:$0xff]
  %v79 = vld [vmem:[%s0 + $0x208] sm:$0xff]
  %v80 = vld [vmem:[%s0 + $0x210] sm:$0xff]
  %v81 = vld [vmem:[%s0 + $0x218] sm:$0xff]
  %v82 = vld [vmem:[%s0 + $0x220] sm:$0xff]
  %v83 = vld [vmem:[%s0 + $0x228] sm:$0xff]
  %v84 = vld [vmem:[%s0 + $0x230] sm:$0xff]
  %v85 = vld [vmem:[%s0 + $0x238] sm:$0xff]
  %v86 = vld [vmem:[%s0 + $0x240] sm:$0xff]
  %v87 = vld [vmem:[%s0 + $0x248] sm:$0xff]
  %v88 = vld [vmem:[%s0 + $0x250] sm:$0xff]
  %v89 = vld [vmem:[%s0 + $0x258] sm:$0xff]
  %v90 = vld [vmem:[%s0 + $0x260] sm:$0xff]
  %v91 = vld [vmem:[%s0 + $0x268] sm:$0xff]
  %v92 = vld [vmem:[%s0 + $0x270] sm:$0xff]
  %v93 = vld [vmem:[%s0 + $0x278] sm:$0xff]
  %v94 = vld [vmem:[%s0 + $0x280] sm:$0xff]
  %v95 = vld [vmem:[%s0 + $0x288] sm:$0xff]
  %v96 = vld [vmem:[%s0 + $0x290] sm:$0xff]
  %v97 = vld [vmem:[%s0 + $0x298] sm:$0xff]
  %v98 = vld [vmem:[%s0 + $0x2a0] sm:$0xff]
  %v99 = vld [vmem:[%s0 + $0x2a8] sm:$0xff]
  %v100 = vld [vmem:[%s0 + $0x2b0] sm:$0xff]
  %v101 = vld [vmem:[%s0 + $0x2b8] sm:$0xff]
  %v102 = vld [vmem:[%s0 + $0x2c0] sm:$0xff]
  %v103 = vld [vmem:[%s0 + $0x2c8] sm:$0xff]
  %v104 = vld [vmem:[%s0 + $0x2d0] sm:$0xff]
  %v105 = vld [vmem:[%s0 + $0x2d8] sm:$0xff]
  %v106 = vld [vmem:[%s0 + $0x2e0] sm:$0xff]
  %v107 = vld [vmem:[%s0 + $0x2e8] sm:$0xff]
  %v108 = vld [vmem:[%s0 + $0x2f0] sm:$0xff]
  %v109 = vld [vmem:[%s0 + $0x2f8] sm:$0xff]
  %v110 = vld [vmem:[%s0 + $0x300] sm:$0xff]
  %v111 = vld [vmem:[%s0 + $0x308] sm:$0xff]
  %v112 = vld [vmem:[%s0 + $0x310] sm:$0xff]
  %v113 = vld [vmem:[%s0 + $0x318] sm:$0xff]
  %v114 = vld [vmem:[%s0 + $0x320] sm:$0xff]
  %v115 = vld [vmem:[%s0 + $0x328] sm:$0xff]
  %v116 = vld [vmem:[%s0 + $0x330] sm:$0xff]
  %v117 = vld [vmem:[%s0 + $0x338] sm:$0xff]
  %v118 = vld [vmem:[%s0 + $0x340] sm:$0xff]
  %v119 = vld [vmem:[%s0 + $0x348] sm:$0xff]
  %v120 = vld [vmem:[%s0 + $0x350] sm:$0xff]
  %v121 = vld [vmem:[%s0 + $0x358] sm:$0xff]
  %vm122 = vcmask 556032
  %v123 = vsel %vm122, %v15, 0.0
  %v124 = vadd.f32 %v14, %v123
  %125 = vadd.xlane.f32.xlu0 %v124
  %v126 = vpop.xlane.xlu0 %125
  %v127 = vsel %vm122, %v17, 0.0
  %v128 = vadd.f32 %v16, %v127
  %129 = vadd.xlane.f32.xlu0 %v128
  %v130 = vpop.xlane.xlu0 %129
  %v131 = vsel %vm122, %v19, 0.0
  %v132 = vadd.f32 %v18, %v131
  %133 = vadd.xlane.f32.xlu0 %v132
  %v134 = vpop.xlane.xlu0 %133
  %v135 = vsel %vm122, %v21, 0.0
  %v136 = vadd.f32 %v20, %v135
  %137 = vadd.xlane.f32.xlu0 %v136
  %v138 = vpop.xlane.xlu0 %137
  %v139 = vsel %vm122, %v23, 0.0
  %v140 = vadd.f32 %v22, %v139
  %141 = vadd.xlane.f32.xlu0 %v140
  %v142 = vpop.xlane.xlu0 %141
  %v143 = vsel %vm122, %v25, 0.0
  %v144 = vadd.f32 %v24, %v143
  %145 = vadd.xlane.f32.xlu0 %v144
  %v146 = vpop.xlane.xlu0 %145
  %v147 = vsel %vm122, %v27, 0.0
  %v148 = vadd.f32 %v26, %v147
  %149 = vadd.xlane.f32.xlu0 %v148
  %v150 = vpop.xlane.xlu0 %149
  %v151 = vsel %vm122, %v29, 0.0
  %v152 = vadd.f32 %v28, %v151
  %153 = vadd.xlane.f32.xlu0 %v152
  %v154 = vpop.xlane.xlu0 %153
  %v155 = vsel %vm122, %v31, 0.0
  %v156 = vadd.f32 %v30, %v155
  %157 = vadd.xlane.f32.xlu0 %v156
  %v158 = vpop.xlane.xlu0 %157
  %v159 = vsel %vm122, %v33, 0.0
  %v160 = vadd.f32 %v32, %v159
  %161 = vadd.xlane.f32.xlu0 %v160
  %v162 = vpop.xlane.xlu0 %161
  %v163 = vsel %vm122, %v35, 0.0
  %v164 = vadd.f32 %v34, %v163
  %165 = vadd.xlane.f32.xlu0 %v164
  %v166 = vpop.xlane.xlu0 %165
  %v167 = vsel %vm122, %v37, 0.0
  %v168 = vadd.f32 %v36, %v167
  %169 = vadd.xlane.f32.xlu0 %v168
  %v170 = vpop.xlane.xlu0 %169
  %v171 = vsel %vm122, %v39, 0.0
  %v172 = vadd.f32 %v38, %v171
  %173 = vadd.xlane.f32.xlu0 %v172
  %v174 = vpop.xlane.xlu0 %173
  %v175 = vsel %vm122, %v41, 0.0
  %v176 = vadd.f32 %v40, %v175
  %177 = vadd.xlane.f32.xlu0 %v176
  %v178 = vpop.xlane.xlu0 %177
  %v179 = vsel %vm122, %v43, 0.0
  %v180 = vadd.f32 %v42, %v179
  %181 = vadd.xlane.f32.xlu0 %v180
  %v182 = vpop.xlane.xlu0 %181
  %v183 = vsel %vm122, %v45, 0.0
  %v184 = vadd.f32 %v44, %v183
  %185 = vadd.xlane.f32.xlu0 %v184
  %v186 = vpop.xlane.xlu0 %185
  %v187 = vsel %vm122, %v47, 0.0
  %v188 = vadd.f32 %v46, %v187
  %189 = vadd.xlane.f32.xlu0 %v188
  %v190 = vpop.xlane.xlu0 %189
  %v191 = vsel %vm122, %v49, 0.0
  %v192 = vadd.f32 %v48, %v191
  %193 = vadd.xlane.f32.xlu0 %v192
  %v194 = vpop.xlane.xlu0 %193
  %v195 = vsel %vm122, %v51, 0.0
  %v196 = vadd.f32 %v50, %v195
  %197 = vadd.xlane.f32.xlu0 %v196
  %v198 = vpop.xlane.xlu0 %197
  %v199 = vsel %vm122, %v53, 0.0
  %v200 = vadd.f32 %v52, %v199
  %201 = vadd.xlane.f32.xlu0 %v200
  %v202 = vpop.xlane.xlu0 %201
  %v203 = vsel %vm122, %v55, 0.0
  %v204 = vadd.f32 %v54, %v203
  %205 = vadd.xlane.f32.xlu0 %v204
  %v206 = vpop.xlane.xlu0 %205
  %v207 = vsel %vm122, %v57, 0.0
  %v208 = vadd.f32 %v56, %v207
  %209 = vadd.xlane.f32.xlu0 %v208
  %v210 = vpop.xlane.xlu0 %209
  %v211 = vsel %vm122, %v59, 0.0
  %v212 = vadd.f32 %v58, %v211
  %213 = vadd.xlane.f32.xlu0 %v212
  %v214 = vpop.xlane.xlu0 %213
  %v215 = vsel %vm122, %v61, 0.0
  %v216 = vadd.f32 %v60, %v215
  %217 = vadd.xlane.f32.xlu0 %v216
  %v218 = vpop.xlane.xlu0 %217
  %v219 = vsel %vm122, %v63, 0.0
  %v220 = vadd.f32 %v62, %v219
  %221 = vadd.xlane.f32.xlu0 %v220
  %v222 = vpop.xlane.xlu0 %221
  %v223 = vsel %vm122, %v65, 0.0
  %v224 = vadd.f32 %v64, %v223
  %225 = vadd.xlane.f32.xlu0 %v224
  %v226 = vpop.xlane.xlu0 %225
  %v227 = vsel %vm122, %v67, 0.0
  %v228 = vadd.f32 %v66, %v227
  %229 = vadd.xlane.f32.xlu0 %v228
  %v230 = vpop.xlane.xlu0 %229
  %v231 = vsel %vm122, %v69, 0.0
  %v232 = vadd.f32 %v68, %v231
  %233 = vadd.xlane.f32.xlu0 %v232
  %v234 = vpop.xlane.xlu0 %233
  %v235 = vsel %vm122, %v71, 0.0
  %v236 = vadd.f32 %v70, %v235
  %237 = vadd.xlane.f32.xlu0 %v236
  %v238 = vpop.xlane.xlu0 %237
  %v239 = vsel %vm122, %v73, 0.0
  %v240 = vadd.f32 %v72, %v239
  %241 = vadd.xlane.f32.xlu0 %v240
  %v242 = vpop.xlane.xlu0 %241
  %v243 = vsel %vm122, %v75, 0.0
  %v244 = vadd.f32 %v74, %v243
  %245 = vadd.xlane.f32.xlu0 %v244
  %v246 = vpop.xlane.xlu0 %245
  %v247 = vsel %vm122, %v77, 0.0
  %v248 = vadd.f32 %v76, %v247
  %249 = vadd.xlane.f32.xlu0 %v248
  %v250 = vpop.xlane.xlu0 %249
  %v251 = vsel %vm122, %v79, 0.0
  %v252 = vadd.f32 %v78, %v251
  %253 = vadd.xlane.f32.xlu0 %v252
  %v254 = vpop.xlane.xlu0 %253
  %v255 = vsel %vm122, %v81, 0.0
  %v256 = vadd.f32 %v80, %v255
  %257 = vadd.xlane.f32.xlu0 %v256
  %v258 = vpop.xlane.xlu0 %257
  %v259 = vsel %vm122, %v83, 0.0
  %v260 = vadd.f32 %v82, %v259
  %261 = vadd.xlane.f32.xlu0 %v260
  %v262 = vpop.xlane.xlu0 %261
  %v263 = vsel %vm122, %v85, 0.0
  %v264 = vadd.f32 %v84, %v263
  %265 = vadd.xlane.f32.xlu0 %v264
  %v266 = vpop.xlane.xlu0 %265
  %v267 = vsel %vm122, %v87, 0.0
  %v268 = vadd.f32 %v86, %v267
  %269 = vadd.xlane.f32.xlu0 %v268
  %v270 = vpop.xlane.xlu0 %269
  %v271 = vsel %vm122, %v89, 0.0
  %v272 = vadd.f32 %v88, %v271
  %273 = vadd.xlane.f32.xlu0 %v272
  %v274 = vpop.xlane.xlu0 %273
  %v275 = vsel %vm122, %v91, 0.0
  %v276 = vadd.f32 %v90, %v275
  %277 = vadd.xlane.f32.xlu0 %v276
  %v278 = vpop.xlane.xlu0 %277
  %v279 = vsel %vm122, %v93, 0.0
  %v280 = vadd.f32 %v92, %v279
  %281 = vadd.xlane.f32.xlu0 %v280
  %v282 = vpop.xlane.xlu0 %281
  %v283 = vsel %vm122, %v95, 0.0
  %v284 = vadd.f32 %v94, %v283
  %285 = vadd.xlane.f32.xlu0 %v284
  %v286 = vpop.xlane.xlu0 %285
  %v287 = vsel %vm122, %v97, 0.0
  %v288 = vadd.f32 %v96, %v287
  %289 = vadd.xlane.f32.xlu0 %v288
  %v290 = vpop.xlane.xlu0 %289
  %v291 = vsel %vm122, %v99, 0.0
  %v292 = vadd.f32 %v98, %v291
  %293 = vadd.xlane.f32.xlu0 %v292
  %v294 = vpop.xlane.xlu0 %293
  %v295 = vsel %vm122, %v101, 0.0
  %v296 = vadd.f32 %v100, %v295
  %297 = vadd.xlane.f32.xlu0 %v296
  %v298 = vpop.xlane.xlu0 %297
  %v299 = vsel %vm122, %v103, 0.0
  %v300 = vadd.f32 %v102, %v299
  %301 = vadd.xlane.f32.xlu0 %v300
  %v302 = vpop.xlane.xlu0 %301
  %v303 = vsel %vm122, %v105, 0.0
  %v304 = vadd.f32 %v104, %v303
  %305 = vadd.xlane.f32.xlu0 %v304
  %v306 = vpop.xlane.xlu0 %305
  %v307 = vsel %vm122, %v107, 0.0
  %v308 = vadd.f32 %v106, %v307
  %309 = vadd.xlane.f32.xlu0 %v308
  %v310 = vpop.xlane.xlu0 %309
  %v311 = vsel %vm122, %v109, 0.0
  %v312 = vadd.f32 %v108, %v311
  %313 = vadd.xlane.f32.xlu0 %v312
  %v314 = vpop.xlane.xlu0 %313
  %v315 = vsel %vm122, %v111, 0.0
  %v316 = vadd.f32 %v110, %v315
  %317 = vadd.xlane.f32.xlu0 %v316
  %v318 = vpop.xlane.xlu0 %317
  %v319 = vsel %vm122, %v113, 0.0
  %v320 = vadd.f32 %v112, %v319
  %321 = vadd.xlane.f32.xlu0 %v320
  %v322 = vpop.xlane.xlu0 %321
  %v323 = vsel %vm122, %v115, 0.0
  %v324 = vadd.f32 %v114, %v323
  %325 = vadd.xlane.f32.xlu0 %v324
  %v326 = vpop.xlane.xlu0 %325
  %v327 = vsel %vm122, %v117, 0.0
  %v328 = vadd.f32 %v116, %v327
  %329 = vadd.xlane.f32.xlu0 %v328
  %v330 = vpop.xlane.xlu0 %329
  %v331 = vsel %vm122, %v119, 0.0
  %v332 = vadd.f32 %v118, %v331
  %333 = vadd.xlane.f32.xlu0 %v332
  %v334 = vpop.xlane.xlu0 %333
  %v335 = vsel %vm122, %v121, 0.0
  %v336 = vadd.f32 %v120, %v335
  %337 = vadd.xlane.f32.xlu0 %v336
  %v338 = vpop.xlane.xlu0 %337
  %v339 = vmul.f32 %v14, %v14
  %v340 = vmul.f32 %v15, %v15
  %v341 = vmul.f32 %v16, %v16
  %v342 = vmul.f32 %v17, %v17
  %v343 = vmul.f32 %v18, %v18
  %v344 = vmul.f32 %v19, %v19
  %v345 = vmul.f32 %v20, %v20
  %v346 = vmul.f32 %v21, %v21
  %v347 = vmul.f32 %v22, %v22
  %v348 = vmul.f32 %v23, %v23
  %v349 = vmul.f32 %v24, %v24
  %v350 = vmul.f32 %v25, %v25
  %v351 = vmul.f32 %v26, %v26
  %v352 = vmul.f32 %v27, %v27
  %v353 = vmul.f32 %v28, %v28
  %v354 = vmul.f32 %v29, %v29
  %v355 = vmul.f32 %v30, %v30
  %v356 = vmul.f32 %v31, %v31
  %v357 = vmul.f32 %v32, %v32
  %v358 = vmul.f32 %v33, %v33
  %v359 = vmul.f32 %v34, %v34
  %v360 = vmul.f32 %v35, %v35
  %v361 = vmul.f32 %v36, %v36
  %v362 = vmul.f32 %v37, %v37
  %v363 = vmul.f32 %v38, %v38
  %v364 = vmul.f32 %v39, %v39
  %v365 = vmul.f32 %v40, %v40
  %v366 = vmul.f32 %v41, %v41
  %v367 = vmul.f32 %v42, %v42
  %v368 = vmul.f32 %v43, %v43
  %v369 = vmul.f32 %v44, %v44
  %v370 = vmul.f32 %v45, %v45
  %v371 = vmul.f32 %v46, %v46
  %v372 = vmul.f32 %v47, %v47
  %v373 = vmul.f32 %v48, %v48
  %v374 = vmul.f32 %v49, %v49
  %v375 = vmul.f32 %v50, %v50
  %v376 = vmul.f32 %v51, %v51
  %v377 = vmul.f32 %v52, %v52
  %v378 = vmul.f32 %v53, %v53
  %v379 = vmul.f32 %v54, %v54
  %v380 = vmul.f32 %v55, %v55
  %v381 = vmul.f32 %v56, %v56
  %v382 = vmul.f32 %v57, %v57
  %v383 = vmul.f32 %v58, %v58
  %v384 = vmul.f32 %v59, %v59
  %v385 = vmul.f32 %v60, %v60
  %v386 = vmul.f32 %v61, %v61
  %v387 = vmul.f32 %v62, %v62
  %v388 = vmul.f32 %v63, %v63
  %v389 = vmul.f32 %v64, %v64
  %v390 = vmul.f32 %v65, %v65
  %v391 = vmul.f32 %v66, %v66
  %v392 = vmul.f32 %v67, %v67
  %v393 = vmul.f32 %v68, %v68
  %v394 = vmul.f32 %v69, %v69
  %v395 = vmul.f32 %v70, %v70
  %v396 = vmul.f32 %v71, %v71
  %v397 = vmul.f32 %v72, %v72
  %v398 = vmul.f32 %v73, %v73
  %v399 = vmul.f32 %v74, %v74
  %v400 = vmul.f32 %v75, %v75
  %v401 = vmul.f32 %v76, %v76
  %v402 = vmul.f32 %v77, %v77
  %v403 = vmul.f32 %v78, %v78
  %v404 = vmul.f32 %v79, %v79
  %v405 = vmul.f32 %v80, %v80
  %v406 = vmul.f32 %v81, %v81
  %v407 = vmul.f32 %v82, %v82
  %v408 = vmul.f32 %v83, %v83
  %v409 = vmul.f32 %v84, %v84
  %v410 = vmul.f32 %v85, %v85
  %v411 = vmul.f32 %v86, %v86
  %v412 = vmul.f32 %v87, %v87
  %v413 = vmul.f32 %v88, %v88
  %v414 = vmul.f32 %v89, %v89
  %v415 = vmul.f32 %v90, %v90
  %v416 = vmul.f32 %v91, %v91
  %v417 = vmul.f32 %v92, %v92
  %v418 = vmul.f32 %v93, %v93
  %v419 = vmul.f32 %v94, %v94
  %v420 = vmul.f32 %v95, %v95
  %v421 = vmul.f32 %v96, %v96
  %v422 = vmul.f32 %v97, %v97
  %v423 = vmul.f32 %v98, %v98
  %v424 = vmul.f32 %v99, %v99
  %v425 = vmul.f32 %v100, %v100
  %v426 = vmul.f32 %v101, %v101
  %v427 = vmul.f32 %v102, %v102
  %v428 = vmul.f32 %v103, %v103
  %v429 = vmul.f32 %v104, %v104
  %v430 = vmul.f32 %v105, %v105
  %v431 = vmul.f32 %v106, %v106
  %v432 = vmul.f32 %v107, %v107
  %v433 = vmul.f32 %v108, %v108
  %v434 = vmul.f32 %v109, %v109
  %v435 = vmul.f32 %v110, %v110
  %v436 = vmul.f32 %v111, %v111
  %v437 = vmul.f32 %v112, %v112
  %v438 = vmul.f32 %v113, %v113
  %v439 = vmul.f32 %v114, %v114
  %v440 = vmul.f32 %v115, %v115
  %v441 = vmul.f32 %v116, %v116
  %v442 = vmul.f32 %v117, %v117
  %v443 = vmul.f32 %v118, %v118
  %v444 = vmul.f32 %v119, %v119
  %v445 = vmul.f32 %v120, %v120
  %v446 = vmul.f32 %v121, %v121
  %v447 = vsel %vm122, %v340, 0.0
  %v448 = vadd.f32 %v339, %v447
  %449 = vadd.xlane.f32.xlu0 %v448
  %v450 = vpop.xlane.xlu0 %449
  %v451 = vsel %vm122, %v342, 0.0
  %v452 = vadd.f32 %v341, %v451
  %453 = vadd.xlane.f32.xlu0 %v452
  %v454 = vpop.xlane.xlu0 %453
  %v455 = vsel %vm122, %v344, 0.0
  %v456 = vadd.f32 %v343, %v455
  %457 = vadd.xlane.f32.xlu0 %v456
  %v458 = vpop.xlane.xlu0 %457
  %v459 = vsel %vm122, %v346, 0.0
  %v460 = vadd.f32 %v345, %v459
  %461 = vadd.xlane.f32.xlu0 %v460
  %v462 = vpop.xlane.xlu0 %461
  %v463 = vsel %vm122, %v348, 0.0
  %v464 = vadd.f32 %v347, %v463
  %465 = vadd.xlane.f32.xlu0 %v464
  %v466 = vpop.xlane.xlu0 %465
  %v467 = vsel %vm122, %v350, 0.0
  %v468 = vadd.f32 %v349, %v467
  %469 = vadd.xlane.f32.xlu0 %v468
  %v470 = vpop.xlane.xlu0 %469
  %v471 = vsel %vm122, %v352, 0.0
  %v472 = vadd.f32 %v351, %v471
  %473 = vadd.xlane.f32.xlu0 %v472
  %v474 = vpop.xlane.xlu0 %473
  %v475 = vsel %vm122, %v354, 0.0
  %v476 = vadd.f32 %v353, %v475
  %477 = vadd.xlane.f32.xlu0 %v476
  %v478 = vpop.xlane.xlu0 %477
  %v479 = vsel %vm122, %v356, 0.0
  %v480 = vadd.f32 %v355, %v479
  %481 = vadd.xlane.f32.xlu0 %v480
  %v482 = vpop.xlane.xlu0 %481
  %v483 = vsel %vm122, %v358, 0.0
  %v484 = vadd.f32 %v357, %v483
  %485 = vadd.xlane.f32.xlu0 %v484
  %v486 = vpop.xlane.xlu0 %485
  %v487 = vsel %vm122, %v360, 0.0
  %v488 = vadd.f32 %v359, %v487
  %489 = vadd.xlane.f32.xlu0 %v488
  %v490 = vpop.xlane.xlu0 %489
  %v491 = vsel %vm122, %v362, 0.0
  %v492 = vadd.f32 %v361, %v491
  %493 = vadd.xlane.f32.xlu0 %v492
  %v494 = vpop.xlane.xlu0 %493
  %v495 = vsel %vm122, %v364, 0.0
  %v496 = vadd.f32 %v363, %v495
  %497 = vadd.xlane.f32.xlu0 %v496
  %v498 = vpop.xlane.xlu0 %497
  %v499 = vsel %vm122, %v366, 0.0
  %v500 = vadd.f32 %v365, %v499
  %501 = vadd.xlane.f32.xlu0 %v500
  %v502 = vpop.xlane.xlu0 %501
  %v503 = vsel %vm122, %v368, 0.0
  %v504 = vadd.f32 %v367, %v503
  %505 = vadd.xlane.f32.xlu0 %v504
  %v506 = vpop.xlane.xlu0 %505
  %v507 = vsel %vm122, %v370, 0.0
  %v508 = vadd.f32 %v369, %v507
  %509 = vadd.xlane.f32.xlu0 %v508
  %v510 = vpop.xlane.xlu0 %509
  %v511 = vsel %vm122, %v372, 0.0
  %v512 = vadd.f32 %v371, %v511
  %513 = vadd.xlane.f32.xlu0 %v512
  %v514 = vpop.xlane.xlu0 %513
  %v515 = vsel %vm122, %v374, 0.0
  %v516 = vadd.f32 %v373, %v515
  %517 = vadd.xlane.f32.xlu0 %v516
  %v518 = vpop.xlane.xlu0 %517
  %v519 = vsel %vm122, %v376, 0.0
  %v520 = vadd.f32 %v375, %v519
  %521 = vadd.xlane.f32.xlu0 %v520
  %v522 = vpop.xlane.xlu0 %521
  %v523 = vsel %vm122, %v378, 0.0
  %v524 = vadd.f32 %v377, %v523
  %525 = vadd.xlane.f32.xlu0 %v524
  %v526 = vpop.xlane.xlu0 %525
  %v527 = vsel %vm122, %v380, 0.0
  %v528 = vadd.f32 %v379, %v527
  %529 = vadd.xlane.f32.xlu0 %v528
  %v530 = vpop.xlane.xlu0 %529
  %v531 = vsel %vm122, %v382, 0.0
  %v532 = vadd.f32 %v381, %v531
  %533 = vadd.xlane.f32.xlu0 %v532
  %v534 = vpop.xlane.xlu0 %533
  %v535 = vsel %vm122, %v384, 0.0
  %v536 = vadd.f32 %v383, %v535
  %537 = vadd.xlane.f32.xlu0 %v536
  %v538 = vpop.xlane.xlu0 %537
  %v539 = vsel %vm122, %v386, 0.0
  %v540 = vadd.f32 %v385, %v539
  %541 = vadd.xlane.f32.xlu0 %v540
  %v542 = vpop.xlane.xlu0 %541
  %v543 = vsel %vm122, %v388, 0.0
  %v544 = vadd.f32 %v387, %v543
  %545 = vadd.xlane.f32.xlu0 %v544
  %v546 = vpop.xlane.xlu0 %545
  %v547 = vsel %vm122, %v390, 0.0
  %v548 = vadd.f32 %v389, %v547
  %549 = vadd.xlane.f32.xlu0 %v548
  %v550 = vpop.xlane.xlu0 %549
  %v551 = vsel %vm122, %v392, 0.0
  %v552 = vadd.f32 %v391, %v551
  %553 = vadd.xlane.f32.xlu0 %v552
  %v554 = vpop.xlane.xlu0 %553
  %v555 = vsel %vm122, %v394, 0.0
  %v556 = vadd.f32 %v393, %v555
  %557 = vadd.xlane.f32.xlu0 %v556
  %v558 = vpop.xlane.xlu0 %557
  %v559 = vsel %vm122, %v396, 0.0
  %v560 = vadd.f32 %v395, %v559
  %561 = vadd.xlane.f32.xlu0 %v560
  %v562 = vpop.xlane.xlu0 %561
  %v563 = vsel %vm122, %v398, 0.0
  %v564 = vadd.f32 %v397, %v563
  %565 = vadd.xlane.f32.xlu0 %v564
  %v566 = vpop.xlane.xlu0 %565
  %v567 = vsel %vm122, %v400, 0.0
  %v568 = vadd.f32 %v399, %v567
  %569 = vadd.xlane.f32.xlu0 %v568
  %v570 = vpop.xlane.xlu0 %569
  %v571 = vsel %vm122, %v402, 0.0
  %v572 = vadd.f32 %v401, %v571
  %573 = vadd.xlane.f32.xlu0 %v572
  %v574 = vpop.xlane.xlu0 %573
  %v575 = vsel %vm122, %v404, 0.0
  %v576 = vadd.f32 %v403, %v575
  %577 = vadd.xlane.f32.xlu0 %v576
  %v578 = vpop.xlane.xlu0 %577
  %v579 = vsel %vm122, %v406, 0.0
  %v580 = vadd.f32 %v405, %v579
  %581 = vadd.xlane.f32.xlu0 %v580
  %v582 = vpop.xlane.xlu0 %581
  %v583 = vsel %vm122, %v408, 0.0
  %v584 = vadd.f32 %v407, %v583
  %585 = vadd.xlane.f32.xlu0 %v584
  %v586 = vpop.xlane.xlu0 %585
  %v587 = vsel %vm122, %v410, 0.0
  %v588 = vadd.f32 %v409, %v587
  %589 = vadd.xlane.f32.xlu0 %v588
  %v590 = vpop.xlane.xlu0 %589
  %v591 = vsel %vm122, %v412, 0.0
  %v592 = vadd.f32 %v411, %v591
  %593 = vadd.xlane.f32.xlu0 %v592
  %v594 = vpop.xlane.xlu0 %593
  %v595 = vsel %vm122, %v414, 0.0
  %v596 = vadd.f32 %v413, %v595
  %597 = vadd.xlane.f32.xlu0 %v596
  %v598 = vpop.xlane.xlu0 %597
  %v599 = vsel %vm122, %v416, 0.0
  %v600 = vadd.f32 %v415, %v599
  %601 = vadd.xlane.f32.xlu0 %v600
  %v602 = vpop.xlane.xlu0 %601
  %v603 = vsel %vm122, %v418, 0.0
  %v604 = vadd.f32 %v417, %v603
  %605 = vadd.xlane.f32.xlu0 %v604
  %v606 = vpop.xlane.xlu0 %605
  %v607 = vsel %vm122, %v420, 0.0
  %v608 = vadd.f32 %v419, %v607
  %609 = vadd.xlane.f32.xlu0 %v608
  %v610 = vpop.xlane.xlu0 %609
  %v611 = vsel %vm122, %v422, 0.0
  %v612 = vadd.f32 %v421, %v611
  %613 = vadd.xlane.f32.xlu0 %v612
  %v614 = vpop.xlane.xlu0 %613
  %v615 = vsel %vm122, %v424, 0.0
  %v616 = vadd.f32 %v423, %v615
  %617 = vadd.xlane.f32.xlu0 %v616
  %v618 = vpop.xlane.xlu0 %617
  %v619 = vsel %vm122, %v426, 0.0
  %v620 = vadd.f32 %v425, %v619
  %621 = vadd.xlane.f32.xlu0 %v620
  %v622 = vpop.xlane.xlu0 %621
  %v623 = vsel %vm122, %v428, 0.0
  %v624 = vadd.f32 %v427, %v623
  %625 = vadd.xlane.f32.xlu0 %v624
  %v626 = vpop.xlane.xlu0 %625
  %v627 = vsel %vm122, %v430, 0.0
  %v628 = vadd.f32 %v429, %v627
  %629 = vadd.xlane.f32.xlu0 %v628
  %v630 = vpop.xlane.xlu0 %629
  %v631 = vsel %vm122, %v432, 0.0
  %v632 = vadd.f32 %v431, %v631
  %633 = vadd.xlane.f32.xlu0 %v632
  %v634 = vpop.xlane.xlu0 %633
  %v635 = vsel %vm122, %v434, 0.0
  %v636 = vadd.f32 %v433, %v635
  %637 = vadd.xlane.f32.xlu0 %v636
  %v638 = vpop.xlane.xlu0 %637
  %v639 = vsel %vm122, %v436, 0.0
  %v640 = vadd.f32 %v435, %v639
  %641 = vadd.xlane.f32.xlu0 %v640
  %v642 = vpop.xlane.xlu0 %641
  %v643 = vsel %vm122, %v438, 0.0
  %v644 = vadd.f32 %v437, %v643
  %645 = vadd.xlane.f32.xlu0 %v644
  %v646 = vpop.xlane.xlu0 %645
  %v647 = vsel %vm122, %v440, 0.0
  %v648 = vadd.f32 %v439, %v647
  %649 = vadd.xlane.f32.xlu0 %v648
  %v650 = vpop.xlane.xlu0 %649
  %v651 = vsel %vm122, %v442, 0.0
  %v652 = vadd.f32 %v441, %v651
  %653 = vadd.xlane.f32.xlu0 %v652
  %v654 = vpop.xlane.xlu0 %653
  %v655 = vsel %vm122, %v444, 0.0
  %v656 = vadd.f32 %v443, %v655
  %657 = vadd.xlane.f32.xlu0 %v656
  %v658 = vpop.xlane.xlu0 %657
  %v659 = vsel %vm122, %v446, 0.0
  %v660 = vadd.f32 %v445, %v659
  %661 = vadd.xlane.f32.xlu0 %v660
  %v662 = vpop.xlane.xlu0 %661
  %v663 = vmul.f32 %v126, 0.0051020407
  %v664 = vmul.f32 %v130, 0.0051020407
  %v665 = vmul.f32 %v134, 0.0051020407
  %v666 = vmul.f32 %v138, 0.0051020407
  %v667 = vmul.f32 %v142, 0.0051020407
  %v668 = vmul.f32 %v146, 0.0051020407
  %v669 = vmul.f32 %v150, 0.0051020407
  %v670 = vmul.f32 %v154, 0.0051020407
  %v671 = vmul.f32 %v158, 0.0051020407
  %v672 = vmul.f32 %v162, 0.0051020407
  %v673 = vmul.f32 %v166, 0.0051020407
  %v674 = vmul.f32 %v170, 0.0051020407
  %v675 = vmul.f32 %v174, 0.0051020407
  %v676 = vmul.f32 %v178, 0.0051020407
  %v677 = vmul.f32 %v182, 0.0051020407
  %v678 = vmul.f32 %v186, 0.0051020407
  %v679 = vmul.f32 %v190, 0.0051020407
  %v680 = vmul.f32 %v194, 0.0051020407
  %v681 = vmul.f32 %v198, 0.0051020407
  %v682 = vmul.f32 %v202, 0.0051020407
  %v683 = vmul.f32 %v206, 0.0051020407
  %v684 = vmul.f32 %v210, 0.0051020407
  %v685 = vmul.f32 %v214, 0.0051020407
  %v686 = vmul.f32 %v218, 0.0051020407
  %v687 = vmul.f32 %v222, 0.0051020407
  %v688 = vmul.f32 %v226, 0.0051020407
  %v689 = vmul.f32 %v230, 0.0051020407
  %v690 = vmul.f32 %v234, 0.0051020407
  %v691 = vmul.f32 %v238, 0.0051020407
  %v692 = vmul.f32 %v242, 0.0051020407
  %v693 = vmul.f32 %v246, 0.0051020407
  %v694 = vmul.f32 %v250, 0.0051020407
  %v695 = vmul.f32 %v254, 0.0051020407
  %v696 = vmul.f32 %v258, 0.0051020407
  %v697 = vmul.f32 %v262, 0.0051020407
  %v698 = vmul.f32 %v266, 0.0051020407
  %v699 = vmul.f32 %v270, 0.0051020407
  %v700 = vmul.f32 %v274, 0.0051020407
  %v701 = vmul.f32 %v278, 0.0051020407
  %v702 = vmul.f32 %v282, 0.0051020407
  %v703 = vmul.f32 %v286, 0.0051020407
  %v704 = vmul.f32 %v290, 0.0051020407
  %v705 = vmul.f32 %v294, 0.0051020407
  %v706 = vmul.f32 %v298, 0.0051020407
  %v707 = vmul.f32 %v302, 0.0051020407
  %v708 = vmul.f32 %v306, 0.0051020407
  %v709 = vmul.f32 %v310, 0.0051020407
  %v710 = vmul.f32 %v314, 0.0051020407
  %v711 = vmul.f32 %v318, 0.0051020407
  %v712 = vmul.f32 %v322, 0.0051020407
  %v713 = vmul.f32 %v326, 0.0051020407
  %v714 = vmul.f32 %v330, 0.0051020407
  %v715 = vmul.f32 %v334, 0.0051020407
  %v716 = vmul.f32 %v338, 0.0051020407
  %v717 = vmul.f32 %v450, 0.0051020407
  %v718 = vmul.f32 %v454, 0.0051020407
  %v719 = vmul.f32 %v458, 0.0051020407
  %v720 = vmul.f32 %v462, 0.0051020407
  %v721 = vmul.f32 %v466, 0.0051020407
  %v722 = vmul.f32 %v470, 0.0051020407
  %v723 = vmul.f32 %v474, 0.0051020407
  %v724 = vmul.f32 %v478, 0.0051020407
  %v725 = vmul.f32 %v482, 0.0051020407
  %v726 = vmul.f32 %v486, 0.0051020407
  %v727 = vmul.f32 %v490, 0.0051020407
  %v728 = vmul.f32 %v494, 0.0051020407
  %v729 = vmul.f32 %v498, 0.0051020407
  %v730 = vmul.f32 %v502, 0.0051020407
  %v731 = vmul.f32 %v506, 0.0051020407
  %v732 = vmul.f32 %v510, 0.0051020407
  %v733 = vmul.f32 %v514, 0.0051020407
  %v734 = vmul.f32 %v518, 0.0051020407
  %v735 = vmul.f32 %v522, 0.0051020407
  %v736 = vmul.f32 %v526, 0.0051020407
  %v737 = vmul.f32 %v530, 0.0051020407
  %v738 = vmul.f32 %v534, 0.0051020407
  %v739 = vmul.f32 %v538, 0.0051020407
  %v740 = vmul.f32 %v542, 0.0051020407
  %v741 = vmul.f32 %v546, 0.0051020407
  %v742 = vmul.f32 %v550, 0.0051020407
  %v743 = vmul.f32 %v554, 0.0051020407
  %v744 = vmul.f32 %v558, 0.0051020407
  %v745 = vmul.f32 %v562, 0.0051020407
  %v746 = vmul.f32 %v566, 0.0051020407
  %v747 = vmul.f32 %v570, 0.0051020407
  %v748 = vmul.f32 %v574, 0.0051020407
  %v749 = vmul.f32 %v578, 0.0051020407
  %v750 = vmul.f32 %v582, 0.0051020407
  %v751 = vmul.f32 %v586, 0.0051020407
  %v752 = vmul.f32 %v590, 0.0051020407
  %v753 = vmul.f32 %v594, 0.0051020407
  %v754 = vmul.f32 %v598, 0.0051020407
  %v755 = vmul.f32 %v602, 0.0051020407
  %v756 = vmul.f32 %v606, 0.0051020407
  %v757 = vmul.f32 %v610, 0.0051020407
  %v758 = vmul.f32 %v614, 0.0051020407
  %v759 = vmul.f32 %v618, 0.0051020407
  %v760 = vmul.f32 %v622, 0.0051020407
  %v761 = vmul.f32 %v626, 0.0051020407
  %v762 = vmul.f32 %v630, 0.0051020407
  %v763 = vmul.f32 %v634, 0.0051020407
  %v764 = vmul.f32 %v638, 0.0051020407
  %v765 = vmul.f32 %v642, 0.0051020407
  %v766 = vmul.f32 %v646, 0.0051020407
  %v767 = vmul.f32 %v650, 0.0051020407
  %v768 = vmul.f32 %v654, 0.0051020407
  %v769 = vmul.f32 %v658, 0.0051020407
  %v770 = vmul.f32 %v662, 0.0051020407
  %v771 = vmul.f32 %v663, %v663
  %v772 = vmul.f32 %v664, %v664
  %v773 = vmul.f32 %v665, %v665
  %v774 = vmul.f32 %v666, %v666
  %v775 = vmul.f32 %v667, %v667
  %v776 = vmul.f32 %v668, %v668
  %v777 = vmul.f32 %v669, %v669
  %v778 = vmul.f32 %v670, %v670
  %v779 = vmul.f32 %v671, %v671
  %v780 = vmul.f32 %v672, %v672
  %v781 = vmul.f32 %v673, %v673
  %v782 = vmul.f32 %v674, %v674
  %v783 = vmul.f32 %v675, %v675
  %v784 = vmul.f32 %v676, %v676
  %v785 = vmul.f32 %v677, %v677
  %v786 = vmul.f32 %v678, %v678
  %v787 = vmul.f32 %v679, %v679
  %v788 = vmul.f32 %v680, %v680
  %v789 = vmul.f32 %v681, %v681
  %v790 = vmul.f32 %v682, %v682
  %v791 = vmul.f32 %v683, %v683
  %v792 = vmul.f32 %v684, %v684
  %v793 = vmul.f32 %v685, %v685
  %v794 = vmul.f32 %v686, %v686
  %v795 = vmul.f32 %v687, %v687
  %v796 = vmul.f32 %v688, %v688
  %v797 = vmul.f32 %v689, %v689
  %v798 = vmul.f32 %v690, %v690
  %v799 = vmul.f32 %v691, %v691
  %v800 = vmul.f32 %v692, %v692
  %v801 = vmul.f32 %v693, %v693
  %v802 = vmul.f32 %v694, %v694
  %v803 = vmul.f32 %v695, %v695
  %v804 = vmul.f32 %v696, %v696
  %v805 = vmul.f32 %v697, %v697
  %v806 = vmul.f32 %v698, %v698
  %v807 = vmul.f32 %v699, %v699
  %v808 = vmul.f32 %v700, %v700
  %v809 = vmul.f32 %v701, %v701
  %v810 = vmul.f32 %v702, %v702
  %v811 = vmul.f32 %v703, %v703
  %v812 = vmul.f32 %v704, %v704
  %v813 = vmul.f32 %v705, %v705
  %v814 = vmul.f32 %v706, %v706
  %v815 = vmul.f32 %v707, %v707
  %v816 = vmul.f32 %v708, %v708
  %v817 = vmul.f32 %v709, %v709
  %v818 = vmul.f32 %v710, %v710
  %v819 = vmul.f32 %v711, %v711
  %v820 = vmul.f32 %v712, %v712
  %v821 = vmul.f32 %v713, %v713
  %v822 = vmul.f32 %v714, %v714
  %v823 = vmul.f32 %v715, %v715
  %v824 = vmul.f32 %v716, %v716
  %v825 = vsub.f32 %v717, %v771
  %v826 = vsub.f32 %v718, %v772
  %v827 = vsub.f32 %v719, %v773
  %v828 = vsub.f32 %v720, %v774
  %v829 = vsub.f32 %v721, %v775
  %v830 = vsub.f32 %v722, %v776
  %v831 = vsub.f32 %v723, %v777
  %v832 = vsub.f32 %v724, %v778
  %v833 = vsub.f32 %v725, %v779
  %v834 = vsub.f32 %v726, %v780
  %v835 = vsub.f32 %v727, %v781
  %v836 = vsub.f32 %v728, %v782
  %v837 = vsub.f32 %v729, %v783
  %v838 = vsub.f32 %v730, %v784
  %v839 = vsub.f32 %v731, %v785
  %v840 = vsub.f32 %v732, %v786
  %v841 = vsub.f32 %v733, %v787
  %v842 = vsub.f32 %v734, %v788
  %v843 = vsub.f32 %v735, %v789
  %v844 = vsub.f32 %v736, %v790
  %v845 = vsub.f32 %v737, %v791
  %v846 = vsub.f32 %v738, %v792
  %v847 = vsub.f32 %v739, %v793
  %v848 = vsub.f32 %v740, %v794
  %v849 = vsub.f32 %v741, %v795
  %v850 = vsub.f32 %v742, %v796
  %v851 = vsub.f32 %v743, %v797
  %v852 = vsub.f32 %v744, %v798
  %v853 = vsub.f32 %v745, %v799
  %v854 = vsub.f32 %v746, %v800
  %v855 = vsub.f32 %v747, %v801
  %v856 = vsub.f32 %v748, %v802
  %v857 = vsub.f32 %v749, %v803
  %v858 = vsub.f32 %v750, %v804
  %v859 = vsub.f32 %v751, %v805
  %v860 = vsub.f32 %v752, %v806
  %v861 = vsub.f32 %v753, %v807
  %v862 = vsub.f32 %v754, %v808
  %v863 = vsub.f32 %v755, %v809
  %v864 = vsub.f32 %v756, %v810
  %v865 = vsub.f32 %v757, %v811
  %v866 = vsub.f32 %v758, %v812
  %v867 = vsub.f32 %v759, %v813
  %v868 = vsub.f32 %v760, %v814
  %v869 = vsub.f32 %v761, %v815
  %v870 = vsub.f32 %v762, %v816
  %v871 = vsub.f32 %v763, %v817
  %v872 = vsub.f32 %v764, %v818
  %v873 = vsub.f32 %v765, %v819
  %v874 = vsub.f32 %v766, %v820
  %v875 = vsub.f32 %v767, %v821
  %v876 = vsub.f32 %v768, %v822
  %v877 = vsub.f32 %v769, %v823
  %v878 = vsub.f32 %v770, %v824
  %v879 = vmax.f32 %v825, 0.0
  %v880 = vmax.f32 %v826, 0.0
  %v881 = vmax.f32 %v827, 0.0
  %v882 = vmax.f32 %v828, 0.0
  %v883 = vmax.f32 %v829, 0.0
  %v884 = vmax.f32 %v830, 0.0
  %v885 = vmax.f32 %v831, 0.0
  %v886 = vmax.f32 %v832, 0.0
  %v887 = vmax.f32 %v833, 0.0
  %v888 = vmax.f32 %v834, 0.0
  %v889 = vmax.f32 %v835, 0.0
  %v890 = vmax.f32 %v836, 0.0
  %v891 = vmax.f32 %v837, 0.0
  %v892 = vmax.f32 %v838, 0.0
  %v893 = vmax.f32 %v839, 0.0
  %v894 = vmax.f32 %v840, 0.0
  %v895 = vmax.f32 %v841, 0.0
  %v896 = vmax.f32 %v842, 0.0
  %v897 = vmax.f32 %v843, 0.0
  %v898 = vmax.f32 %v844, 0.0
  %v899 = vmax.f32 %v845, 0.0
  %v900 = vmax.f32 %v846, 0.0
  %v901 = vmax.f32 %v847, 0.0
  %v902 = vmax.f32 %v848, 0.0
  %v903 = vmax.f32 %v849, 0.0
  %v904 = vmax.f32 %v850, 0.0
  %v905 = vmax.f32 %v851, 0.0
  %v906 = vmax.f32 %v852, 0.0
  %v907 = vmax.f32 %v853, 0.0
  %v908 = vmax.f32 %v854, 0.0
  %v909 = vmax.f32 %v855, 0.0
  %v910 = vmax.f32 %v856, 0.0
  %v911 = vmax.f32 %v857, 0.0
  %v912 = vmax.f32 %v858, 0.0
  %v913 = vmax.f32 %v859, 0.0
  %v914 = vmax.f32 %v860, 0.0
  %v915 = vmax.f32 %v861, 0.0
  %v916 = vmax.f32 %v862, 0.0
  %v917 = vmax.f32 %v863, 0.0
  %v918 = vmax.f32 %v864, 0.0
  %v919 = vmax.f32 %v865, 0.0
  %v920 = vmax.f32 %v866, 0.0
  %v921 = vmax.f32 %v867, 0.0
  %v922 = vmax.f32 %v868, 0.0
  %v923 = vmax.f32 %v869, 0.0
  %v924 = vmax.f32 %v870, 0.0
  %v925 = vmax.f32 %v871, 0.0
  %v926 = vmax.f32 %v872, 0.0
  %v927 = vmax.f32 %v873, 0.0
  %v928 = vmax.f32 %v874, 0.0
  %v929 = vmax.f32 %v875, 0.0
  %v930 = vmax.f32 %v876, 0.0
  %v931 = vmax.f32 %v877, 0.0
  %v932 = vmax.f32 %v878, 0.0
  %v933 = vadd.f32 %v879, 1e-05
  %v934 = vadd.f32 %v880, 1e-05
  %v935 = vadd.f32 %v881, 1e-05
  %v936 = vadd.f32 %v882, 1e-05
  %v937 = vadd.f32 %v883, 1e-05
  %v938 = vadd.f32 %v884, 1e-05
  %v939 = vadd.f32 %v885, 1e-05
  %v940 = vadd.f32 %v886, 1e-05
  %v941 = vadd.f32 %v887, 1e-05
  %v942 = vadd.f32 %v888, 1e-05
  %v943 = vadd.f32 %v889, 1e-05
  %v944 = vadd.f32 %v890, 1e-05
  %v945 = vadd.f32 %v891, 1e-05
  %v946 = vadd.f32 %v892, 1e-05
  %v947 = vadd.f32 %v893, 1e-05
  %v948 = vadd.f32 %v894, 1e-05
  %v949 = vadd.f32 %v895, 1e-05
  %v950 = vadd.f32 %v896, 1e-05
  %v951 = vadd.f32 %v897, 1e-05
  %v952 = vadd.f32 %v898, 1e-05
  %v953 = vadd.f32 %v899, 1e-05
  %v954 = vadd.f32 %v900, 1e-05
  %v955 = vadd.f32 %v901, 1e-05
  %v956 = vadd.f32 %v902, 1e-05
  %v957 = vadd.f32 %v903, 1e-05
  %v958 = vadd.f32 %v904, 1e-05
  %v959 = vadd.f32 %v905, 1e-05
  %v960 = vadd.f32 %v906, 1e-05
  %v961 = vadd.f32 %v907, 1e-05
  %v962 = vadd.f32 %v908, 1e-05
  %v963 = vadd.f32 %v909, 1e-05
  %v964 = vadd.f32 %v910, 1e-05
  %v965 = vadd.f32 %v911, 1e-05
  %v966 = vadd.f32 %v912, 1e-05
  %v967 = vadd.f32 %v913, 1e-05
  %v968 = vadd.f32 %v914, 1e-05
  %v969 = vadd.f32 %v915, 1e-05
  %v970 = vadd.f32 %v916, 1e-05
  %v971 = vadd.f32 %v917, 1e-05
  %v972 = vadd.f32 %v918, 1e-05
  %v973 = vadd.f32 %v919, 1e-05
  %v974 = vadd.f32 %v920, 1e-05
  %v975 = vadd.f32 %v921, 1e-05
  %v976 = vadd.f32 %v922, 1e-05
  %v977 = vadd.f32 %v923, 1e-05
  %v978 = vadd.f32 %v924, 1e-05
  %v979 = vadd.f32 %v925, 1e-05
  %v980 = vadd.f32 %v926, 1e-05
  %v981 = vadd.f32 %v927, 1e-05
  %v982 = vadd.f32 %v928, 1e-05
  %v983 = vadd.f32 %v929, 1e-05
  %v984 = vadd.f32 %v930, 1e-05
  %v985 = vadd.f32 %v931, 1e-05
  %v986 = vadd.f32 %v932, 1e-05
  %v987 = vrsqrt.pop %v933
  %v988 = vmul.f32 %v987, %v933
  %v989 = vmul.f32 %v988, %v987
  %v990 = vmul.f32 0.5, %v989
  %v991 = vsub.f32 1.5, %v990
  %v992 = vmul.f32 %v987, %v991
  %vm993 = vweird.f32 %v933
  %vm994 = vweird.f32 %v987
  %vm995 = vmor %vm993, %vm994
  %v996 = vsel %vm995, %v987, %v992
  %v997 = vrsqrt.pop %v934
  %v998 = vmul.f32 %v997, %v934
  %v999 = vmul.f32 %v998, %v997
  %v1000 = vmul.f32 0.5, %v999
  %v1001 = vsub.f32 1.5, %v1000
  %v1002 = vmul.f32 %v997, %v1001
  %vm1003 = vweird.f32 %v934
  %vm1004 = vweird.f32 %v997
  %vm1005 = vmor %vm1003, %vm1004
  %v1006 = vsel %vm1005, %v997, %v1002
  %v1007 = vrsqrt.pop %v935
  %v1008 = vmul.f32 %v1007, %v935
  %v1009 = vmul.f32 %v1008, %v1007
  %v1010 = vmul.f32 0.5, %v1009
  %v1011 = vsub.f32 1.5, %v1010
  %v1012 = vmul.f32 %v1007, %v1011
  %vm1013 = vweird.f32 %v935
  %vm1014 = vweird.f32 %v1007
  %vm1015 = vmor %vm1013, %vm1014
  %v1016 = vsel %vm1015, %v1007, %v1012
  %v1017 = vrsqrt.pop %v936
  %v1018 = vmul.f32 %v1017, %v936
  %v1019 = vmul.f32 %v1018, %v1017
  %v1020 = vmul.f32 0.5, %v1019
  %v1021 = vsub.f32 1.5, %v1020
  %v1022 = vmul.f32 %v1017, %v1021
  %vm1023 = vweird.f32 %v936
  %vm1024 = vweird.f32 %v1017
  %vm1025 = vmor %vm1023, %vm1024
  %v1026 = vsel %vm1025, %v1017, %v1022
  %v1027 = vrsqrt.pop %v937
  %v1028 = vmul.f32 %v1027, %v937
  %v1029 = vmul.f32 %v1028, %v1027
  %v1030 = vmul.f32 0.5, %v1029
  %v1031 = vsub.f32 1.5, %v1030
  %v1032 = vmul.f32 %v1027, %v1031
  %vm1033 = vweird.f32 %v937
  %vm1034 = vweird.f32 %v1027
  %vm1035 = vmor %vm1033, %vm1034
  %v1036 = vsel %vm1035, %v1027, %v1032
  %v1037 = vrsqrt.pop %v938
  %v1038 = vmul.f32 %v1037, %v938
  %v1039 = vmul.f32 %v1038, %v1037
  %v1040 = vmul.f32 0.5, %v1039
  %v1041 = vsub.f32 1.5, %v1040
  %v1042 = vmul.f32 %v1037, %v1041
  %vm1043 = vweird.f32 %v938
  %vm1044 = vweird.f32 %v1037
  %vm1045 = vmor %vm1043, %vm1044
  %v1046 = vsel %vm1045, %v1037, %v1042
  %v1047 = vrsqrt.pop %v939
  %v1048 = vmul.f32 %v1047, %v939
  %v1049 = vmul.f32 %v1048, %v1047
  %v1050 = vmul.f32 0.5, %v1049
  %v1051 = vsub.f32 1.5, %v1050
  %v1052 = vmul.f32 %v1047, %v1051
  %vm1053 = vweird.f32 %v939
  %vm1054 = vweird.f32 %v1047
  %vm1055 = vmor %vm1053, %vm1054
  %v1056 = vsel %vm1055, %v1047, %v1052
  %v1057 = vrsqrt.pop %v940
  %v1058 = vmul.f32 %v1057, %v940
  %v1059 = vmul.f32 %v1058, %v1057
  %v1060 = vmul.f32 0.5, %v1059
  %v1061 = vsub.f32 1.5, %v1060
  %v1062 = vmul.f32 %v1057, %v1061
  %vm1063 = vweird.f32 %v940
  %vm1064 = vweird.f32 %v1057
  %vm1065 = vmor %vm1063, %vm1064
  %v1066 = vsel %vm1065, %v1057, %v1062
  %v1067 = vrsqrt.pop %v941
  %v1068 = vmul.f32 %v1067, %v941
  %v1069 = vmul.f32 %v1068, %v1067
  %v1070 = vmul.f32 0.5, %v1069
  %v1071 = vsub.f32 1.5, %v1070
  %v1072 = vmul.f32 %v1067, %v1071
  %vm1073 = vweird.f32 %v941
  %vm1074 = vweird.f32 %v1067
  %vm1075 = vmor %vm1073, %vm1074
  %v1076 = vsel %vm1075, %v1067, %v1072
  %v1077 = vrsqrt.pop %v942
  %v1078 = vmul.f32 %v1077, %v942
  %v1079 = vmul.f32 %v1078, %v1077
  %v1080 = vmul.f32 0.5, %v1079
  %v1081 = vsub.f32 1.5, %v1080
  %v1082 = vmul.f32 %v1077, %v1081
  %vm1083 = vweird.f32 %v942
  %vm1084 = vweird.f32 %v1077
  %vm1085 = vmor %vm1083, %vm1084
  %v1086 = vsel %vm1085, %v1077, %v1082
  %v1087 = vrsqrt.pop %v943
  %v1088 = vmul.f32 %v1087, %v943
  %v1089 = vmul.f32 %v1088, %v1087
  %v1090 = vmul.f32 0.5, %v1089
  %v1091 = vsub.f32 1.5, %v1090
  %v1092 = vmul.f32 %v1087, %v1091
  %vm1093 = vweird.f32 %v943
  %vm1094 = vweird.f32 %v1087
  %vm1095 = vmor %vm1093, %vm1094
  %v1096 = vsel %vm1095, %v1087, %v1092
  %v1097 = vrsqrt.pop %v944
  %v1098 = vmul.f32 %v1097, %v944
  %v1099 = vmul.f32 %v1098, %v1097
  %v1100 = vmul.f32 0.5, %v1099
  %v1101 = vsub.f32 1.5, %v1100
  %v1102 = vmul.f32 %v1097, %v1101
  %vm1103 = vweird.f32 %v944
  %vm1104 = vweird.f32 %v1097
  %vm1105 = vmor %vm1103, %vm1104
  %v1106 = vsel %vm1105, %v1097, %v1102
  %v1107 = vrsqrt.pop %v945
  %v1108 = vmul.f32 %v1107, %v945
  %v1109 = vmul.f32 %v1108, %v1107
  %v1110 = vmul.f32 0.5, %v1109
  %v1111 = vsub.f32 1.5, %v1110
  %v1112 = vmul.f32 %v1107, %v1111
  %vm1113 = vweird.f32 %v945
  %vm1114 = vweird.f32 %v1107
  %vm1115 = vmor %vm1113, %vm1114
  %v1116 = vsel %vm1115, %v1107, %v1112
  %v1117 = vrsqrt.pop %v946
  %v1118 = vmul.f32 %v1117, %v946
  %v1119 = vmul.f32 %v1118, %v1117
  %v1120 = vmul.f32 0.5, %v1119
  %v1121 = vsub.f32 1.5, %v1120
  %v1122 = vmul.f32 %v1117, %v1121
  %vm1123 = vweird.f32 %v946
  %vm1124 = vweird.f32 %v1117
  %vm1125 = vmor %vm1123, %vm1124
  %v1126 = vsel %vm1125, %v1117, %v1122
  %v1127 = vrsqrt.pop %v947
  %v1128 = vmul.f32 %v1127, %v947
  %v1129 = vmul.f32 %v1128, %v1127
  %v1130 = vmul.f32 0.5, %v1129
  %v1131 = vsub.f32 1.5, %v1130
  %v1132 = vmul.f32 %v1127, %v1131
  %vm1133 = vweird.f32 %v947
  %vm1134 = vweird.f32 %v1127
  %vm1135 = vmor %vm1133, %vm1134
  %v1136 = vsel %vm1135, %v1127, %v1132
  %v1137 = vrsqrt.pop %v948
  %v1138 = vmul.f32 %v1137, %v948
  %v1139 = vmul.f32 %v1138, %v1137
  %v1140 = vmul.f32 0.5, %v1139
  %v1141 = vsub.f32 1.5, %v1140
  %v1142 = vmul.f32 %v1137, %v1141
  %vm1143 = vweird.f32 %v948
  %vm1144 = vweird.f32 %v1137
  %vm1145 = vmor %vm1143, %vm1144
  %v1146 = vsel %vm1145, %v1137, %v1142
  %v1147 = vrsqrt.pop %v949
  %v1148 = vmul.f32 %v1147, %v949
  %v1149 = vmul.f32 %v1148, %v1147
  %v1150 = vmul.f32 0.5, %v1149
  %v1151 = vsub.f32 1.5, %v1150
  %v1152 = vmul.f32 %v1147, %v1151
  %vm1153 = vweird.f32 %v949
  %vm1154 = vweird.f32 %v1147
  %vm1155 = vmor %vm1153, %vm1154
  %v1156 = vsel %vm1155, %v1147, %v1152
  %v1157 = vrsqrt.pop %v950
  %v1158 = vmul.f32 %v1157, %v950
  %v1159 = vmul.f32 %v1158, %v1157
  %v1160 = vmul.f32 0.5, %v1159
  %v1161 = vsub.f32 1.5, %v1160
  %v1162 = vmul.f32 %v1157, %v1161
  %vm1163 = vweird.f32 %v950
  %vm1164 = vweird.f32 %v1157
  %vm1165 = vmor %vm1163, %vm1164
  %v1166 = vsel %vm1165, %v1157, %v1162
  %v1167 = vrsqrt.pop %v951
  %v1168 = vmul.f32 %v1167, %v951
  %v1169 = vmul.f32 %v1168, %v1167
  %v1170 = vmul.f32 0.5, %v1169
  %v1171 = vsub.f32 1.5, %v1170
  %v1172 = vmul.f32 %v1167, %v1171
  %vm1173 = vweird.f32 %v951
  %vm1174 = vweird.f32 %v1167
  %vm1175 = vmor %vm1173, %vm1174
  %v1176 = vsel %vm1175, %v1167, %v1172
  %v1177 = vrsqrt.pop %v952
  %v1178 = vmul.f32 %v1177, %v952
  %v1179 = vmul.f32 %v1178, %v1177
  %v1180 = vmul.f32 0.5, %v1179
  %v1181 = vsub.f32 1.5, %v1180
  %v1182 = vmul.f32 %v1177, %v1181
  %vm1183 = vweird.f32 %v952
  %vm1184 = vweird.f32 %v1177
  %vm1185 = vmor %vm1183, %vm1184
  %v1186 = vsel %vm1185, %v1177, %v1182
  %v1187 = vrsqrt.pop %v953
  %v1188 = vmul.f32 %v1187, %v953
  %v1189 = vmul.f32 %v1188, %v1187
  %v1190 = vmul.f32 0.5, %v1189
  %v1191 = vsub.f32 1.5, %v1190
  %v1192 = vmul.f32 %v1187, %v1191
  %vm1193 = vweird.f32 %v953
  %vm1194 = vweird.f32 %v1187
  %vm1195 = vmor %vm1193, %vm1194
  %v1196 = vsel %vm1195, %v1187, %v1192
  %v1197 = vrsqrt.pop %v954
  %v1198 = vmul.f32 %v1197, %v954
  %v1199 = vmul.f32 %v1198, %v1197
  %v1200 = vmul.f32 0.5, %v1199
  %v1201 = vsub.f32 1.5, %v1200
  %v1202 = vmul.f32 %v1197, %v1201
  %vm1203 = vweird.f32 %v954
  %vm1204 = vweird.f32 %v1197
  %vm1205 = vmor %vm1203, %vm1204
  %v1206 = vsel %vm1205, %v1197, %v1202
  %v1207 = vrsqrt.pop %v955
  %v1208 = vmul.f32 %v1207, %v955
  %v1209 = vmul.f32 %v1208, %v1207
  %v1210 = vmul.f32 0.5, %v1209
  %v1211 = vsub.f32 1.5, %v1210
  %v1212 = vmul.f32 %v1207, %v1211
  %vm1213 = vweird.f32 %v955
  %vm1214 = vweird.f32 %v1207
  %vm1215 = vmor %vm1213, %vm1214
  %v1216 = vsel %vm1215, %v1207, %v1212
  %v1217 = vrsqrt.pop %v956
  %v1218 = vmul.f32 %v1217, %v956
  %v1219 = vmul.f32 %v1218, %v1217
  %v1220 = vmul.f32 0.5, %v1219
  %v1221 = vsub.f32 1.5, %v1220
  %v1222 = vmul.f32 %v1217, %v1221
  %vm1223 = vweird.f32 %v956
  %vm1224 = vweird.f32 %v1217
  %vm1225 = vmor %vm1223, %vm1224
  %v1226 = vsel %vm1225, %v1217, %v1222
  %v1227 = vrsqrt.pop %v957
  %v1228 = vmul.f32 %v1227, %v957
  %v1229 = vmul.f32 %v1228, %v1227
  %v1230 = vmul.f32 0.5, %v1229
  %v1231 = vsub.f32 1.5, %v1230
  %v1232 = vmul.f32 %v1227, %v1231
  %vm1233 = vweird.f32 %v957
  %vm1234 = vweird.f32 %v1227
  %vm1235 = vmor %vm1233, %vm1234
  %v1236 = vsel %vm1235, %v1227, %v1232
  %v1237 = vrsqrt.pop %v958
  %v1238 = vmul.f32 %v1237, %v958
  %v1239 = vmul.f32 %v1238, %v1237
  %v1240 = vmul.f32 0.5, %v1239
  %v1241 = vsub.f32 1.5, %v1240
  %v1242 = vmul.f32 %v1237, %v1241
  %vm1243 = vweird.f32 %v958
  %vm1244 = vweird.f32 %v1237
  %vm1245 = vmor %vm1243, %vm1244
  %v1246 = vsel %vm1245, %v1237, %v1242
  %v1247 = vrsqrt.pop %v959
  %v1248 = vmul.f32 %v1247, %v959
  %v1249 = vmul.f32 %v1248, %v1247
  %v1250 = vmul.f32 0.5, %v1249
  %v1251 = vsub.f32 1.5, %v1250
  %v1252 = vmul.f32 %v1247, %v1251
  %vm1253 = vweird.f32 %v959
  %vm1254 = vweird.f32 %v1247
  %vm1255 = vmor %vm1253, %vm1254
  %v1256 = vsel %vm1255, %v1247, %v1252
  %v1257 = vrsqrt.pop %v960
  %v1258 = vmul.f32 %v1257, %v960
  %v1259 = vmul.f32 %v1258, %v1257
  %v1260 = vmul.f32 0.5, %v1259
  %v1261 = vsub.f32 1.5, %v1260
  %v1262 = vmul.f32 %v1257, %v1261
  %vm1263 = vweird.f32 %v960
  %vm1264 = vweird.f32 %v1257
  %vm1265 = vmor %vm1263, %vm1264
  %v1266 = vsel %vm1265, %v1257, %v1262
  %v1267 = vrsqrt.pop %v961
  %v1268 = vmul.f32 %v1267, %v961
  %v1269 = vmul.f32 %v1268, %v1267
  %v1270 = vmul.f32 0.5, %v1269
  %v1271 = vsub.f32 1.5, %v1270
  %v1272 = vmul.f32 %v1267, %v1271
  %vm1273 = vweird.f32 %v961
  %vm1274 = vweird.f32 %v1267
  %vm1275 = vmor %vm1273, %vm1274
  %v1276 = vsel %vm1275, %v1267, %v1272
  %v1277 = vrsqrt.pop %v962
  %v1278 = vmul.f32 %v1277, %v962
  %v1279 = vmul.f32 %v1278, %v1277
  %v1280 = vmul.f32 0.5, %v1279
  %v1281 = vsub.f32 1.5, %v1280
  %v1282 = vmul.f32 %v1277, %v1281
  %vm1283 = vweird.f32 %v962
  %vm1284 = vweird.f32 %v1277
  %vm1285 = vmor %vm1283, %vm1284
  %v1286 = vsel %vm1285, %v1277, %v1282
  %v1287 = vrsqrt.pop %v963
  %v1288 = vmul.f32 %v1287, %v963
  %v1289 = vmul.f32 %v1288, %v1287
  %v1290 = vmul.f32 0.5, %v1289
  %v1291 = vsub.f32 1.5, %v1290
  %v1292 = vmul.f32 %v1287, %v1291
  %vm1293 = vweird.f32 %v963
  %vm1294 = vweird.f32 %v1287
  %vm1295 = vmor %vm1293, %vm1294
  %v1296 = vsel %vm1295, %v1287, %v1292
  %v1297 = vrsqrt.pop %v964
  %v1298 = vmul.f32 %v1297, %v964
  %v1299 = vmul.f32 %v1298, %v1297
  %v1300 = vmul.f32 0.5, %v1299
  %v1301 = vsub.f32 1.5, %v1300
  %v1302 = vmul.f32 %v1297, %v1301
  %vm1303 = vweird.f32 %v964
  %vm1304 = vweird.f32 %v1297
  %vm1305 = vmor %vm1303, %vm1304
  %v1306 = vsel %vm1305, %v1297, %v1302
  %v1307 = vrsqrt.pop %v965
  %v1308 = vmul.f32 %v1307, %v965
  %v1309 = vmul.f32 %v1308, %v1307
  %v1310 = vmul.f32 0.5, %v1309
  %v1311 = vsub.f32 1.5, %v1310
  %v1312 = vmul.f32 %v1307, %v1311
  %vm1313 = vweird.f32 %v965
  %vm1314 = vweird.f32 %v1307
  %vm1315 = vmor %vm1313, %vm1314
  %v1316 = vsel %vm1315, %v1307, %v1312
  %v1317 = vrsqrt.pop %v966
  %v1318 = vmul.f32 %v1317, %v966
  %v1319 = vmul.f32 %v1318, %v1317
  %v1320 = vmul.f32 0.5, %v1319
  %v1321 = vsub.f32 1.5, %v1320
  %v1322 = vmul.f32 %v1317, %v1321
  %vm1323 = vweird.f32 %v966
  %vm1324 = vweird.f32 %v1317
  %vm1325 = vmor %vm1323, %vm1324
  %v1326 = vsel %vm1325, %v1317, %v1322
  %v1327 = vrsqrt.pop %v967
  %v1328 = vmul.f32 %v1327, %v967
  %v1329 = vmul.f32 %v1328, %v1327
  %v1330 = vmul.f32 0.5, %v1329
  %v1331 = vsub.f32 1.5, %v1330
  %v1332 = vmul.f32 %v1327, %v1331
  %vm1333 = vweird.f32 %v967
  %vm1334 = vweird.f32 %v1327
  %vm1335 = vmor %vm1333, %vm1334
  %v1336 = vsel %vm1335, %v1327, %v1332
  %v1337 = vrsqrt.pop %v968
  %v1338 = vmul.f32 %v1337, %v968
  %v1339 = vmul.f32 %v1338, %v1337
  %v1340 = vmul.f32 0.5, %v1339
  %v1341 = vsub.f32 1.5, %v1340
  %v1342 = vmul.f32 %v1337, %v1341
  %vm1343 = vweird.f32 %v968
  %vm1344 = vweird.f32 %v1337
  %vm1345 = vmor %vm1343, %vm1344
  %v1346 = vsel %vm1345, %v1337, %v1342
  %v1347 = vrsqrt.pop %v969
  %v1348 = vmul.f32 %v1347, %v969
  %v1349 = vmul.f32 %v1348, %v1347
  %v1350 = vmul.f32 0.5, %v1349
  %v1351 = vsub.f32 1.5, %v1350
  %v1352 = vmul.f32 %v1347, %v1351
  %vm1353 = vweird.f32 %v969
  %vm1354 = vweird.f32 %v1347
  %vm1355 = vmor %vm1353, %vm1354
  %v1356 = vsel %vm1355, %v1347, %v1352
  %v1357 = vrsqrt.pop %v970
  %v1358 = vmul.f32 %v1357, %v970
  %v1359 = vmul.f32 %v1358, %v1357
  %v1360 = vmul.f32 0.5, %v1359
  %v1361 = vsub.f32 1.5, %v1360
  %v1362 = vmul.f32 %v1357, %v1361
  %vm1363 = vweird.f32 %v970
  %vm1364 = vweird.f32 %v1357
  %vm1365 = vmor %vm1363, %vm1364
  %v1366 = vsel %vm1365, %v1357, %v1362
  %v1367 = vrsqrt.pop %v971
  %v1368 = vmul.f32 %v1367, %v971
  %v1369 = vmul.f32 %v1368, %v1367
  %v1370 = vmul.f32 0.5, %v1369
  %v1371 = vsub.f32 1.5, %v1370
  %v1372 = vmul.f32 %v1367, %v1371
  %vm1373 = vweird.f32 %v971
  %vm1374 = vweird.f32 %v1367
  %vm1375 = vmor %vm1373, %vm1374
  %v1376 = vsel %vm1375, %v1367, %v1372
  %v1377 = vrsqrt.pop %v972
  %v1378 = vmul.f32 %v1377, %v972
  %v1379 = vmul.f32 %v1378, %v1377
  %v1380 = vmul.f32 0.5, %v1379
  %v1381 = vsub.f32 1.5, %v1380
  %v1382 = vmul.f32 %v1377, %v1381
  %vm1383 = vweird.f32 %v972
  %vm1384 = vweird.f32 %v1377
  %vm1385 = vmor %vm1383, %vm1384
  %v1386 = vsel %vm1385, %v1377, %v1382
  %v1387 = vrsqrt.pop %v973
  %v1388 = vmul.f32 %v1387, %v973
  %v1389 = vmul.f32 %v1388, %v1387
  %v1390 = vmul.f32 0.5, %v1389
  %v1391 = vsub.f32 1.5, %v1390
  %v1392 = vmul.f32 %v1387, %v1391
  %vm1393 = vweird.f32 %v973
  %vm1394 = vweird.f32 %v1387
  %vm1395 = vmor %vm1393, %vm1394
  %v1396 = vsel %vm1395, %v1387, %v1392
  %v1397 = vrsqrt.pop %v974
  %v1398 = vmul.f32 %v1397, %v974
  %v1399 = vmul.f32 %v1398, %v1397
  %v1400 = vmul.f32 0.5, %v1399
  %v1401 = vsub.f32 1.5, %v1400
  %v1402 = vmul.f32 %v1397, %v1401
  %vm1403 = vweird.f32 %v974
  %vm1404 = vweird.f32 %v1397
  %vm1405 = vmor %vm1403, %vm1404
  %v1406 = vsel %vm1405, %v1397, %v1402
  %v1407 = vrsqrt.pop %v975
  %v1408 = vmul.f32 %v1407, %v975
  %v1409 = vmul.f32 %v1408, %v1407
  %v1410 = vmul.f32 0.5, %v1409
  %v1411 = vsub.f32 1.5, %v1410
  %v1412 = vmul.f32 %v1407, %v1411
  %vm1413 = vweird.f32 %v975
  %vm1414 = vweird.f32 %v1407
  %vm1415 = vmor %vm1413, %vm1414
  %v1416 = vsel %vm1415, %v1407, %v1412
  %v1417 = vrsqrt.pop %v976
  %v1418 = vmul.f32 %v1417, %v976
  %v1419 = vmul.f32 %v1418, %v1417
  %v1420 = vmul.f32 0.5, %v1419
  %v1421 = vsub.f32 1.5, %v1420
  %v1422 = vmul.f32 %v1417, %v1421
  %vm1423 = vweird.f32 %v976
  %vm1424 = vweird.f32 %v1417
  %vm1425 = vmor %vm1423, %vm1424
  %v1426 = vsel %vm1425, %v1417, %v1422
  %v1427 = vrsqrt.pop %v977
  %v1428 = vmul.f32 %v1427, %v977
  %v1429 = vmul.f32 %v1428, %v1427
  %v1430 = vmul.f32 0.5, %v1429
  %v1431 = vsub.f32 1.5, %v1430
  %v1432 = vmul.f32 %v1427, %v1431
  %vm1433 = vweird.f32 %v977
  %vm1434 = vweird.f32 %v1427
  %vm1435 = vmor %vm1433, %vm1434
  %v1436 = vsel %vm1435, %v1427, %v1432
  %v1437 = vrsqrt.pop %v978
  %v1438 = vmul.f32 %v1437, %v978
  %v1439 = vmul.f32 %v1438, %v1437
  %v1440 = vmul.f32 0.5, %v1439
  %v1441 = vsub.f32 1.5, %v1440
  %v1442 = vmul.f32 %v1437, %v1441
  %vm1443 = vweird.f32 %v978
  %vm1444 = vweird.f32 %v1437
  %vm1445 = vmor %vm1443, %vm1444
  %v1446 = vsel %vm1445, %v1437, %v1442
  %v1447 = vrsqrt.pop %v979
  %v1448 = vmul.f32 %v1447, %v979
  %v1449 = vmul.f32 %v1448, %v1447
  %v1450 = vmul.f32 0.5, %v1449
  %v1451 = vsub.f32 1.5, %v1450
  %v1452 = vmul.f32 %v1447, %v1451
  %vm1453 = vweird.f32 %v979
  %vm1454 = vweird.f32 %v1447
  %vm1455 = vmor %vm1453, %vm1454
  %v1456 = vsel %vm1455, %v1447, %v1452
  %v1457 = vrsqrt.pop %v980
  %v1458 = vmul.f32 %v1457, %v980
  %v1459 = vmul.f32 %v1458, %v1457
  %v1460 = vmul.f32 0.5, %v1459
  %v1461 = vsub.f32 1.5, %v1460
  %v1462 = vmul.f32 %v1457, %v1461
  %vm1463 = vweird.f32 %v980
  %vm1464 = vweird.f32 %v1457
  %vm1465 = vmor %vm1463, %vm1464
  %v1466 = vsel %vm1465, %v1457, %v1462
  %v1467 = vrsqrt.pop %v981
  %v1468 = vmul.f32 %v1467, %v981
  %v1469 = vmul.f32 %v1468, %v1467
  %v1470 = vmul.f32 0.5, %v1469
  %v1471 = vsub.f32 1.5, %v1470
  %v1472 = vmul.f32 %v1467, %v1471
  %vm1473 = vweird.f32 %v981
  %vm1474 = vweird.f32 %v1467
  %vm1475 = vmor %vm1473, %vm1474
  %v1476 = vsel %vm1475, %v1467, %v1472
  %v1477 = vrsqrt.pop %v982
  %v1478 = vmul.f32 %v1477, %v982
  %v1479 = vmul.f32 %v1478, %v1477
  %v1480 = vmul.f32 0.5, %v1479
  %v1481 = vsub.f32 1.5, %v1480
  %v1482 = vmul.f32 %v1477, %v1481
  %vm1483 = vweird.f32 %v982
  %vm1484 = vweird.f32 %v1477
  %vm1485 = vmor %vm1483, %vm1484
  %v1486 = vsel %vm1485, %v1477, %v1482
  %v1487 = vrsqrt.pop %v983
  %v1488 = vmul.f32 %v1487, %v983
  %v1489 = vmul.f32 %v1488, %v1487
  %v1490 = vmul.f32 0.5, %v1489
  %v1491 = vsub.f32 1.5, %v1490
  %v1492 = vmul.f32 %v1487, %v1491
  %vm1493 = vweird.f32 %v983
  %vm1494 = vweird.f32 %v1487
  %vm1495 = vmor %vm1493, %vm1494
  %v1496 = vsel %vm1495, %v1487, %v1492
  %v1497 = vrsqrt.pop %v984
  %v1498 = vmul.f32 %v1497, %v984
  %v1499 = vmul.f32 %v1498, %v1497
  %v1500 = vmul.f32 0.5, %v1499
  %v1501 = vsub.f32 1.5, %v1500
  %v1502 = vmul.f32 %v1497, %v1501
  %vm1503 = vweird.f32 %v984
  %vm1504 = vweird.f32 %v1497
  %vm1505 = vmor %vm1503, %vm1504
  %v1506 = vsel %vm1505, %v1497, %v1502
  %v1507 = vrsqrt.pop %v985
  %v1508 = vmul.f32 %v1507, %v985
  %v1509 = vmul.f32 %v1508, %v1507
  %v1510 = vmul.f32 0.5, %v1509
  %v1511 = vsub.f32 1.5, %v1510
  %v1512 = vmul.f32 %v1507, %v1511
  %vm1513 = vweird.f32 %v985
  %vm1514 = vweird.f32 %v1507
  %vm1515 = vmor %vm1513, %vm1514
  %v1516 = vsel %vm1515, %v1507, %v1512
  %v1517 = vrsqrt.pop %v986
  %v1518 = vmul.f32 %v1517, %v986
  %v1519 = vmul.f32 %v1518, %v1517
  %v1520 = vmul.f32 0.5, %v1519
  %v1521 = vsub.f32 1.5, %v1520
  %v1522 = vmul.f32 %v1517, %v1521
  %vm1523 = vweird.f32 %v986
  %vm1524 = vweird.f32 %v1517
  %vm1525 = vmor %vm1523, %vm1524
  %v1526 = vsel %vm1525, %v1517, %v1522
  %v1527 = vld [vmem:[%s1] sm:$0xff]
  %v1528 = vld [vmem:[%s1 + $0x8] sm:$0xff]
  %v1529 = vld [vmem:[%s1 + $0x10] sm:$0xff]
  %v1530 = vld [vmem:[%s1 + $0x18] sm:$0xff]
  %v1531 = vld [vmem:[%s1 + $0x20] sm:$0xff]
  %v1532 = vld [vmem:[%s1 + $0x28] sm:$0xff]
  %v1533 = vld [vmem:[%s1 + $0x30] sm:$0xff]
  %v1534 = vld [vmem:[%s1 + $0x38] sm:$0xff]
  %v1535 = vld [vmem:[%s1 + $0x40] sm:$0xff]
  %v1536 = vld [vmem:[%s1 + $0x48] sm:$0xff]
  %v1537 = vld [vmem:[%s1 + $0x50] sm:$0xff]
  %v1538 = vld [vmem:[%s1 + $0x58] sm:$0xff]
  %v1539 = vld [vmem:[%s1 + $0x60] sm:$0xff]
  %v1540 = vld [vmem:[%s1 + $0x68] sm:$0xff]
  %v1541 = vld [vmem:[%s1 + $0x70] sm:$0xff]
  %v1542 = vld [vmem:[%s1 + $0x78] sm:$0xff]
  %v1543 = vld [vmem:[%s1 + $0x80] sm:$0xff]
  %v1544 = vld [vmem:[%s1 + $0x88] sm:$0xff]
  %v1545 = vld [vmem:[%s1 + $0x90] sm:$0xff]
  %v1546 = vld [vmem:[%s1 + $0x98] sm:$0xff]
  %v1547 = vld [vmem:[%s1 + $0xa0] sm:$0xff]
  %v1548 = vld [vmem:[%s1 + $0xa8] sm:$0xff]
  %v1549 = vld [vmem:[%s1 + $0xb0] sm:$0xff]
  %v1550 = vld [vmem:[%s1 + $0xb8] sm:$0xff]
  %v1551 = vld [vmem:[%s1 + $0xc0] sm:$0xff]
  %v1552 = vld [vmem:[%s1 + $0xc8] sm:$0xff]
  %v1553 = vld [vmem:[%s1 + $0xd0] sm:$0xff]
  %v1554 = vld [vmem:[%s1 + $0xd8] sm:$0xff]
  %v1555 = vld [vmem:[%s1 + $0xe0] sm:$0xff]
  %v1556 = vld [vmem:[%s1 + $0xe8] sm:$0xff]
  %v1557 = vld [vmem:[%s1 + $0xf0] sm:$0xff]
  %v1558 = vld [vmem:[%s1 + $0xf8] sm:$0xff]
  %v1559 = vld [vmem:[%s1 + $0x100] sm:$0xff]
  %v1560 = vld [vmem:[%s1 + $0x108] sm:$0xff]
  %v1561 = vld [vmem:[%s1 + $0x110] sm:$0xff]
  %v1562 = vld [vmem:[%s1 + $0x118] sm:$0xff]
  %v1563 = vld [vmem:[%s1 + $0x120] sm:$0xff]
  %v1564 = vld [vmem:[%s1 + $0x128] sm:$0xff]
  %v1565 = vld [vmem:[%s1 + $0x130] sm:$0xff]
  %v1566 = vld [vmem:[%s1 + $0x138] sm:$0xff]
  %v1567 = vld [vmem:[%s1 + $0x140] sm:$0xff]
  %v1568 = vld [vmem:[%s1 + $0x148] sm:$0xff]
  %v1569 = vld [vmem:[%s1 + $0x150] sm:$0xff]
  %v1570 = vld [vmem:[%s1 + $0x158] sm:$0xff]
  %v1571 = vld [vmem:[%s1 + $0x160] sm:$0xff]
  %v1572 = vld [vmem:[%s1 + $0x168] sm:$0xff]
  %v1573 = vld [vmem:[%s1 + $0x170] sm:$0xff]
  %v1574 = vld [vmem:[%s1 + $0x178] sm:$0xff]
  %v1575 = vld [vmem:[%s1 + $0x180] sm:$0xff]
  %v1576 = vld [vmem:[%s1 + $0x188] sm:$0xff]
  %v1577 = vld [vmem:[%s1 + $0x190] sm:$0xff]
  %v1578 = vld [vmem:[%s1 + $0x198] sm:$0xff]
  %v1579 = vld [vmem:[%s1 + $0x1a0] sm:$0xff]
  %v1580 = vld [vmem:[%s1 + $0x1a8] sm:$0xff]
  %v1581 = vmul.f32 %v1527, %v996
  %v1582 = vmul.f32 %v1528, %v1006
  %v1583 = vmul.f32 %v1529, %v1016
  %v1584 = vmul.f32 %v1530, %v1026
  %v1585 = vmul.f32 %v1531, %v1036
  %v1586 = vmul.f32 %v1532, %v1046
  %v1587 = vmul.f32 %v1533, %v1056
  %v1588 = vmul.f32 %v1534, %v1066
  %v1589 = vmul.f32 %v1535, %v1076
  %v1590 = vmul.f32 %v1536, %v1086
  %v1591 = vmul.f32 %v1537, %v1096
  %v1592 = vmul.f32 %v1538, %v1106
  %v1593 = vmul.f32 %v1539, %v1116
  %v1594 = vmul.f32 %v1540, %v1126
  %v1595 = vmul.f32 %v1541, %v1136
  %v1596 = vmul.f32 %v1542, %v1146
  %v1597 = vmul.f32 %v1543, %v1156
  %v1598 = vmul.f32 %v1544, %v1166
  %v1599 = vmul.f32 %v1545, %v1176
  %v1600 = vmul.f32 %v1546, %v1186
  %v1601 = vmul.f32 %v1547, %v1196
  %v1602 = vmul.f32 %v1548, %v1206
  %v1603 = vmul.f32 %v1549, %v1216
  %v1604 = vmul.f32 %v1550, %v1226
  %v1605 = vmul.f32 %v1551, %v1236
  %v1606 = vmul.f32 %v1552, %v1246
  %v1607 = vmul.f32 %v1553, %v1256
  %v1608 = vmul.f32 %v1554, %v1266
  %v1609 = vmul.f32 %v1555, %v1276
  %v1610 = vmul.f32 %v1556, %v1286
  %v1611 = vmul.f32 %v1557, %v1296
  %v1612 = vmul.f32 %v1558, %v1306
  %v1613 = vmul.f32 %v1559, %v1316
  %v1614 = vmul.f32 %v1560, %v1326
  %v1615 = vmul.f32 %v1561, %v1336
  %v1616 = vmul.f32 %v1562, %v1346
  %v1617 = vmul.f32 %v1563, %v1356
  %v1618 = vmul.f32 %v1564, %v1366
  %v1619 = vmul.f32 %v1565, %v1376
  %v1620 = vmul.f32 %v1566, %v1386
  %v1621 = vmul.f32 %v1567, %v1396
  %v1622 = vmul.f32 %v1568, %v1406
  %v1623 = vmul.f32 %v1569, %v1416
  %v1624 = vmul.f32 %v1570, %v1426
  %v1625 = vmul.f32 %v1571, %v1436
  %v1626 = vmul.f32 %v1572, %v1446
  %v1627 = vmul.f32 %v1573, %v1456
  %v1628 = vmul.f32 %v1574, %v1466
  %v1629 = vmul.f32 %v1575, %v1476
  %v1630 = vmul.f32 %v1576, %v1486
  %v1631 = vmul.f32 %v1577, %v1496
  %v1632 = vmul.f32 %v1578, %v1506
  %v1633 = vmul.f32 %v1579, %v1516
  %v1634 = vmul.f32 %v1580, %v1526
  %v1635 = vld [vmem:[%s2] sm:$0xff]
  %v1636 = vld [vmem:[%s2 + $0x8] sm:$0xff]
  %v1637 = vld [vmem:[%s2 + $0x10] sm:$0xff]
  %v1638 = vld [vmem:[%s2 + $0x18] sm:$0xff]
  %v1639 = vld [vmem:[%s2 + $0x20] sm:$0xff]
  %v1640 = vld [vmem:[%s2 + $0x28] sm:$0xff]
  %v1641 = vld [vmem:[%s2 + $0x30] sm:$0xff]
  %v1642 = vld [vmem:[%s2 + $0x38] sm:$0xff]
  %v1643 = vld [vmem:[%s2 + $0x40] sm:$0xff]
  %v1644 = vld [vmem:[%s2 + $0x48] sm:$0xff]
  %v1645 = vld [vmem:[%s2 + $0x50] sm:$0xff]
  %v1646 = vld [vmem:[%s2 + $0x58] sm:$0xff]
  %v1647 = vld [vmem:[%s2 + $0x60] sm:$0xff]
  %v1648 = vld [vmem:[%s2 + $0x68] sm:$0xff]
  %v1649 = vld [vmem:[%s2 + $0x70] sm:$0xff]
  %v1650 = vld [vmem:[%s2 + $0x78] sm:$0xff]
  %v1651 = vld [vmem:[%s2 + $0x80] sm:$0xff]
  %v1652 = vld [vmem:[%s2 + $0x88] sm:$0xff]
  %v1653 = vld [vmem:[%s2 + $0x90] sm:$0xff]
  %v1654 = vld [vmem:[%s2 + $0x98] sm:$0xff]
  %v1655 = vld [vmem:[%s2 + $0xa0] sm:$0xff]
  %v1656 = vld [vmem:[%s2 + $0xa8] sm:$0xff]
  %v1657 = vld [vmem:[%s2 + $0xb0] sm:$0xff]
  %v1658 = vld [vmem:[%s2 + $0xb8] sm:$0xff]
  %v1659 = vld [vmem:[%s2 + $0xc0] sm:$0xff]
  %v1660 = vld [vmem:[%s2 + $0xc8] sm:$0xff]
  %v1661 = vld [vmem:[%s2 + $0xd0] sm:$0xff]
  %v1662 = vld [vmem:[%s2 + $0xd8] sm:$0xff]
  %v1663 = vld [vmem:[%s2 + $0xe0] sm:$0xff]
  %v1664 = vld [vmem:[%s2 + $0xe8] sm:$0xff]
  %v1665 = vld [vmem:[%s2 + $0xf0] sm:$0xff]
  %v1666 = vld [vmem:[%s2 + $0xf8] sm:$0xff]
  %v1667 = vld [vmem:[%s2 + $0x100] sm:$0xff]
  %v1668 = vld [vmem:[%s2 + $0x108] sm:$0xff]
  %v1669 = vld [vmem:[%s2 + $0x110] sm:$0xff]
  %v1670 = vld [vmem:[%s2 + $0x118] sm:$0xff]
  %v1671 = vld [vmem:[%s2 + $0x120] sm:$0xff]
  %v1672 = vld [vmem:[%s2 + $0x128] sm:$0xff]
  %v1673 = vld [vmem:[%s2 + $0x130] sm:$0xff]
  %v1674 = vld [vmem:[%s2 + $0x138] sm:$0xff]
  %v1675 = vld [vmem:[%s2 + $0x140] sm:$0xff]
  %v1676 = vld [vmem:[%s2 + $0x148] sm:$0xff]
  %v1677 = vld [vmem:[%s2 + $0x150] sm:$0xff]
  %v1678 = vld [vmem:[%s2 + $0x158] sm:$0xff]
  %v1679 = vld [vmem:[%s2 + $0x160] sm:$0xff]
  %v1680 = vld [vmem:[%s2 + $0x168] sm:$0xff]
  %v1681 = vld [vmem:[%s2 + $0x170] sm:$0xff]
  %v1682 = vld [vmem:[%s2 + $0x178] sm:$0xff]
  %v1683 = vld [vmem:[%s2 + $0x180] sm:$0xff]
  %v1684 = vld [vmem:[%s2 + $0x188] sm:$0xff]
  %v1685 = vld [vmem:[%s2 + $0x190] sm:$0xff]
  %v1686 = vld [vmem:[%s2 + $0x198] sm:$0xff]
  %v1687 = vld [vmem:[%s2 + $0x1a0] sm:$0xff]
  %v1688 = vld [vmem:[%s2 + $0x1a8] sm:$0xff]
  %v1689 = vmul.f32 %v663, %v1581
  %v1690 = vmul.f32 %v664, %v1582
  %v1691 = vmul.f32 %v665, %v1583
  %v1692 = vmul.f32 %v666, %v1584
  %v1693 = vmul.f32 %v667, %v1585
  %v1694 = vmul.f32 %v668, %v1586
  %v1695 = vmul.f32 %v669, %v1587
  %v1696 = vmul.f32 %v670, %v1588
  %v1697 = vmul.f32 %v671, %v1589
  %v1698 = vmul.f32 %v672, %v1590
  %v1699 = vmul.f32 %v673, %v1591
  %v1700 = vmul.f32 %v674, %v1592
  %v1701 = vmul.f32 %v675, %v1593
  %v1702 = vmul.f32 %v676, %v1594
  %v1703 = vmul.f32 %v677, %v1595
  %v1704 = vmul.f32 %v678, %v1596
  %v1705 = vmul.f32 %v679, %v1597
  %v1706 = vmul.f32 %v680, %v1598
  %v1707 = vmul.f32 %v681, %v1599
  %v1708 = vmul.f32 %v682, %v1600
  %v1709 = vmul.f32 %v683, %v1601
  %v1710 = vmul.f32 %v684, %v1602
  %v1711 = vmul.f32 %v685, %v1603
  %v1712 = vmul.f32 %v686, %v1604
  %v1713 = vmul.f32 %v687, %v1605
  %v1714 = vmul.f32 %v688, %v1606
  %v1715 = vmul.f32 %v689, %v1607
  %v1716 = vmul.f32 %v690, %v1608
  %v1717 = vmul.f32 %v691, %v1609
  %v1718 = vmul.f32 %v692, %v1610
  %v1719 = vmul.f32 %v693, %v1611
  %v1720 = vmul.f32 %v694, %v1612
  %v1721 = vmul.f32 %v695, %v1613
  %v1722 = vmul.f32 %v696, %v1614
  %v1723 = vmul.f32 %v697, %v1615
  %v1724 = vmul.f32 %v698, %v1616
  %v1725 = vmul.f32 %v699, %v1617
  %v1726 = vmul.f32 %v700, %v1618
  %v1727 = vmul.f32 %v701, %v1619
  %v1728 = vmul.f32 %v702, %v1620
  %v1729 = vmul.f32 %v703, %v1621
  %v1730 = vmul.f32 %v704, %v1622
  %v1731 = vmul.f32 %v705, %v1623
  %v1732 = vmul.f32 %v706, %v1624
  %v1733 = vmul.f32 %v707, %v1625
  %v1734 = vmul.f32 %v708, %v1626
  %v1735 = vmul.f32 %v709, %v1627
  %v1736 = vmul.f32 %v710, %v1628
  %v1737 = vmul.f32 %v711, %v1629
  %v1738 = vmul.f32 %v712, %v1630
  %v1739 = vmul.f32 %v713, %v1631
  %v1740 = vmul.f32 %v714, %v1632
  %v1741 = vmul.f32 %v715, %v1633
  %v1742 = vmul.f32 %v716, %v1634
  %v1743 = vsub.f32 %v1635, %v1689
  %v1744 = vsub.f32 %v1636, %v1690
  %v1745 = vsub.f32 %v1637, %v1691
  %v1746 = vsub.f32 %v1638, %v1692
  %v1747 = vsub.f32 %v1639, %v1693
  %v1748 = vsub.f32 %v1640, %v1694
  %v1749 = vsub.f32 %v1641, %v1695
  %v1750 = vsub.f32 %v1642, %v1696
  %v1751 = vsub.f32 %v1643, %v1697
  %v1752 = vsub.f32 %v1644, %v1698
  %v1753 = vsub.f32 %v1645, %v1699
  %v1754 = vsub.f32 %v1646, %v1700
  %v1755 = vsub.f32 %v1647, %v1701
  %v1756 = vsub.f32 %v1648, %v1702
  %v1757 = vsub.f32 %v1649, %v1703
  %v1758 = vsub.f32 %v1650, %v1704
  %v1759 = vsub.f32 %v1651, %v1705
  %v1760 = vsub.f32 %v1652, %v1706
  %v1761 = vsub.f32 %v1653, %v1707
  %v1762 = vsub.f32 %v1654, %v1708
  %v1763 = vsub.f32 %v1655, %v1709
  %v1764 = vsub.f32 %v1656, %v1710
  %v1765 = vsub.f32 %v1657, %v1711
  %v1766 = vsub.f32 %v1658, %v1712
  %v1767 = vsub.f32 %v1659, %v1713
  %v1768 = vsub.f32 %v1660, %v1714
  %v1769 = vsub.f32 %v1661, %v1715
  %v1770 = vsub.f32 %v1662, %v1716
  %v1771 = vsub.f32 %v1663, %v1717
  %v1772 = vsub.f32 %v1664, %v1718
  %v1773 = vsub.f32 %v1665, %v1719
  %v1774 = vsub.f32 %v1666, %v1720
  %v1775 = vsub.f32 %v1667, %v1721
  %v1776 = vsub.f32 %v1668, %v1722
  %v1777 = vsub.f32 %v1669, %v1723
  %v1778 = vsub.f32 %v1670, %v1724
  %v1779 = vsub.f32 %v1671, %v1725
  %v1780 = vsub.f32 %v1672, %v1726
  %v1781 = vsub.f32 %v1673, %v1727
  %v1782 = vsub.f32 %v1674, %v1728
  %v1783 = vsub.f32 %v1675, %v1729
  %v1784 = vsub.f32 %v1676, %v1730
  %v1785 = vsub.f32 %v1677, %v1731
  %v1786 = vsub.f32 %v1678, %v1732
  %v1787 = vsub.f32 %v1679, %v1733
  %v1788 = vsub.f32 %v1680, %v1734
  %v1789 = vsub.f32 %v1681, %v1735
  %v1790 = vsub.f32 %v1682, %v1736
  %v1791 = vsub.f32 %v1683, %v1737
  %v1792 = vsub.f32 %v1684, %v1738
  %v1793 = vsub.f32 %v1685, %v1739
  %v1794 = vsub.f32 %v1686, %v1740
  %v1795 = vsub.f32 %v1687, %v1741
  %v1796 = vsub.f32 %v1688, %v1742
  %1798 = vset.pattern.permute.xlu0 0
  %1799 = vperm.xlu0 %1798, %v1581
  %v1800 = vpop.permute.xlu0 %1799
  %1803 = vset.pattern.permute.xlu0 0
  %1804 = vperm.xlu0 %1803, %v1582
  %v1805 = vpop.permute.xlu0 %1804
  %1808 = vset.pattern.permute.xlu0 0
  %1809 = vperm.xlu0 %1808, %v1583
  %v1810 = vpop.permute.xlu0 %1809
  %1813 = vset.pattern.permute.xlu0 0
  %1814 = vperm.xlu0 %1813, %v1584
  %v1815 = vpop.permute.xlu0 %1814
  %1818 = vset.pattern.permute.xlu0 0
  %1819 = vperm.xlu0 %1818, %v1585
  %v1820 = vpop.permute.xlu0 %1819
  %1823 = vset.pattern.permute.xlu0 0
  %1824 = vperm.xlu0 %1823, %v1586
  %v1825 = vpop.permute.xlu0 %1824
  %1828 = vset.pattern.permute.xlu0 0
  %1829 = vperm.xlu0 %1828, %v1587
  %v1830 = vpop.permute.xlu0 %1829
  %1833 = vset.pattern.permute.xlu0 0
  %1834 = vperm.xlu0 %1833, %v1588
  %v1835 = vpop.permute.xlu0 %1834
  %1838 = vset.pattern.permute.xlu0 0
  %1839 = vperm.xlu0 %1838, %v1589
  %v1840 = vpop.permute.xlu0 %1839
  %1843 = vset.pattern.permute.xlu0 0
  %1844 = vperm.xlu0 %1843, %v1590
  %v1845 = vpop.permute.xlu0 %1844
  %1848 = vset.pattern.permute.xlu0 0
  %1849 = vperm.xlu0 %1848, %v1591
  %v1850 = vpop.permute.xlu0 %1849
  %1853 = vset.pattern.permute.xlu0 0
  %1854 = vperm.xlu0 %1853, %v1592
  %v1855 = vpop.permute.xlu0 %1854
  %1858 = vset.pattern.permute.xlu0 0
  %1859 = vperm.xlu0 %1858, %v1593
  %v1860 = vpop.permute.xlu0 %1859
  %1863 = vset.pattern.permute.xlu0 0
  %1864 = vperm.xlu0 %1863, %v1594
  %v1865 = vpop.permute.xlu0 %1864
  %1868 = vset.pattern.permute.xlu0 0
  %1869 = vperm.xlu0 %1868, %v1595
  %v1870 = vpop.permute.xlu0 %1869
  %1873 = vset.pattern.permute.xlu0 0
  %1874 = vperm.xlu0 %1873, %v1596
  %v1875 = vpop.permute.xlu0 %1874
  %1878 = vset.pattern.permute.xlu0 0
  %1879 = vperm.xlu0 %1878, %v1597
  %v1880 = vpop.permute.xlu0 %1879
  %1883 = vset.pattern.permute.xlu0 0
  %1884 = vperm.xlu0 %1883, %v1598
  %v1885 = vpop.permute.xlu0 %1884
  %1888 = vset.pattern.permute.xlu0 0
  %1889 = vperm.xlu0 %1888, %v1599
  %v1890 = vpop.permute.xlu0 %1889
  %1893 = vset.pattern.permute.xlu0 0
  %1894 = vperm.xlu0 %1893, %v1600
  %v1895 = vpop.permute.xlu0 %1894
  %1898 = vset.pattern.permute.xlu0 0
  %1899 = vperm.xlu0 %1898, %v1601
  %v1900 = vpop.permute.xlu0 %1899
  %1903 = vset.pattern.permute.xlu0 0
  %1904 = vperm.xlu0 %1903, %v1602
  %v1905 = vpop.permute.xlu0 %1904
  %1908 = vset.pattern.permute.xlu0 0
  %1909 = vperm.xlu0 %1908, %v1603
  %v1910 = vpop.permute.xlu0 %1909
  %1913 = vset.pattern.permute.xlu0 0
  %1914 = vperm.xlu0 %1913, %v1604
  %v1915 = vpop.permute.xlu0 %1914
  %1918 = vset.pattern.permute.xlu0 0
  %1919 = vperm.xlu0 %1918, %v1605
  %v1920 = vpop.permute.xlu0 %1919
  %1923 = vset.pattern.permute.xlu0 0
  %1924 = vperm.xlu0 %1923, %v1606
  %v1925 = vpop.permute.xlu0 %1924
  %1928 = vset.pattern.permute.xlu0 0
  %1929 = vperm.xlu0 %1928, %v1607
  %v1930 = vpop.permute.xlu0 %1929
  %1933 = vset.pattern.permute.xlu0 0
  %1934 = vperm.xlu0 %1933, %v1608
  %v1935 = vpop.permute.xlu0 %1934
  %1938 = vset.pattern.permute.xlu0 0
  %1939 = vperm.xlu0 %1938, %v1609
  %v1940 = vpop.permute.xlu0 %1939
  %1943 = vset.pattern.permute.xlu0 0
  %1944 = vperm.xlu0 %1943, %v1610
  %v1945 = vpop.permute.xlu0 %1944
  %1948 = vset.pattern.permute.xlu0 0
  %1949 = vperm.xlu0 %1948, %v1611
  %v1950 = vpop.permute.xlu0 %1949
  %1953 = vset.pattern.permute.xlu0 0
  %1954 = vperm.xlu0 %1953, %v1612
  %v1955 = vpop.permute.xlu0 %1954
  %1958 = vset.pattern.permute.xlu0 0
  %1959 = vperm.xlu0 %1958, %v1613
  %v1960 = vpop.permute.xlu0 %1959
  %1963 = vset.pattern.permute.xlu0 0
  %1964 = vperm.xlu0 %1963, %v1614
  %v1965 = vpop.permute.xlu0 %1964
  %1968 = vset.pattern.permute.xlu0 0
  %1969 = vperm.xlu0 %1968, %v1615
  %v1970 = vpop.permute.xlu0 %1969
  %1973 = vset.pattern.permute.xlu0 0
  %1974 = vperm.xlu0 %1973, %v1616
  %v1975 = vpop.permute.xlu0 %1974
  %1978 = vset.pattern.permute.xlu0 0
  %1979 = vperm.xlu0 %1978, %v1617
  %v1980 = vpop.permute.xlu0 %1979
  %1983 = vset.pattern.permute.xlu0 0
  %1984 = vperm.xlu0 %1983, %v1618
  %v1985 = vpop.permute.xlu0 %1984
  %1988 = vset.pattern.permute.xlu0 0
  %1989 = vperm.xlu0 %1988, %v1619
  %v1990 = vpop.permute.xlu0 %1989
  %1993 = vset.pattern.permute.xlu0 0
  %1994 = vperm.xlu0 %1993, %v1620
  %v1995 = vpop.permute.xlu0 %1994
  %1998 = vset.pattern.permute.xlu0 0
  %1999 = vperm.xlu0 %1998, %v1621
  %v2000 = vpop.permute.xlu0 %1999
  %2003 = vset.pattern.permute.xlu0 0
  %2004 = vperm.xlu0 %2003, %v1622
  %v2005 = vpop.permute.xlu0 %2004
  %2008 = vset.pattern.permute.xlu0 0
  %2009 = vperm.xlu0 %2008, %v1623
  %v2010 = vpop.permute.xlu0 %2009
  %2013 = vset.pattern.permute.xlu0 0
  %2014 = vperm.xlu0 %2013, %v1624
  %v2015 = vpop.permute.xlu0 %2014
  %2018 = vset.pattern.permute.xlu0 0
  %2019 = vperm.xlu0 %2018, %v1625
  %v2020 = vpop.permute.xlu0 %2019
  %2023 = vset.pattern.permute.xlu0 0
  %2024 = vperm.xlu0 %2023, %v1626
  %v2025 = vpop.permute.xlu0 %2024
  %2028 = vset.pattern.permute.xlu0 0
  %2029 = vperm.xlu0 %2028, %v1627
  %v2030 = vpop.permute.xlu0 %2029
  %2033 = vset.pattern.permute.xlu0 0
  %2034 = vperm.xlu0 %2033, %v1628
  %v2035 = vpop.permute.xlu0 %2034
  %2038 = vset.pattern.permute.xlu0 0
  %2039 = vperm.xlu0 %2038, %v1629
  %v2040 = vpop.permute.xlu0 %2039
  %2043 = vset.pattern.permute.xlu0 0
  %2044 = vperm.xlu0 %2043, %v1630
  %v2045 = vpop.permute.xlu0 %2044
  %2048 = vset.pattern.permute.xlu0 0
  %2049 = vperm.xlu0 %2048, %v1631
  %v2050 = vpop.permute.xlu0 %2049
  %2053 = vset.pattern.permute.xlu0 0
  %2054 = vperm.xlu0 %2053, %v1632
  %v2055 = vpop.permute.xlu0 %2054
  %2058 = vset.pattern.permute.xlu0 0
  %2059 = vperm.xlu0 %2058, %v1633
  %v2060 = vpop.permute.xlu0 %2059
  %2063 = vset.pattern.permute.xlu0 0
  %2064 = vperm.xlu0 %2063, %v1634
  %v2065 = vpop.permute.xlu0 %2064
  %v2067 = vmul.f32 %v14, %v1800
  %v2068 = vmul.f32 %v15, %v1800
  %v2069 = vmul.f32 %v16, %v1805
  %v2070 = vmul.f32 %v17, %v1805
  %v2071 = vmul.f32 %v18, %v1810
  %v2072 = vmul.f32 %v19, %v1810
  %v2073 = vmul.f32 %v20, %v1815
  %v2074 = vmul.f32 %v21, %v1815
  %v2075 = vmul.f32 %v22, %v1820
  %v2076 = vmul.f32 %v23, %v1820
  %v2077 = vmul.f32 %v24, %v1825
  %v2078 = vmul.f32 %v25, %v1825
  %v2079 = vmul.f32 %v26, %v1830
  %v2080 = vmul.f32 %v27, %v1830
  %v2081 = vmul.f32 %v28, %v1835
  %v2082 = vmul.f32 %v29, %v1835
  %v2083 = vmul.f32 %v30, %v1840
  %v2084 = vmul.f32 %v31, %v1840
  %v2085 = vmul.f32 %v32, %v1845
  %v2086 = vmul.f32 %v33, %v1845
  %v2087 = vmul.f32 %v34, %v1850
  %v2088 = vmul.f32 %v35, %v1850
  %v2089 = vmul.f32 %v36, %v1855
  %v2090 = vmul.f32 %v37, %v1855
  %v2091 = vmul.f32 %v38, %v1860
  %v2092 = vmul.f32 %v39, %v1860
  %v2093 = vmul.f32 %v40, %v1865
  %v2094 = vmul.f32 %v41, %v1865
  %v2095 = vmul.f32 %v42, %v1870
  %v2096 = vmul.f32 %v43, %v1870
  %v2097 = vmul.f32 %v44, %v1875
  %v2098 = vmul.f32 %v45, %v1875
  %v2099 = vmul.f32 %v46, %v1880
  %v2100 = vmul.f32 %v47, %v1880
  %v2101 = vmul.f32 %v48, %v1885
  %v2102 = vmul.f32 %v49, %v1885
  %v2103 = vmul.f32 %v50, %v1890
  %v2104 = vmul.f32 %v51, %v1890
  %v2105 = vmul.f32 %v52, %v1895
  %v2106 = vmul.f32 %v53, %v1895
  %v2107 = vmul.f32 %v54, %v1900
  %v2108 = vmul.f32 %v55, %v1900
  %v2109 = vmul.f32 %v56, %v1905
  %v2110 = vmul.f32 %v57, %v1905
  %v2111 = vmul.f32 %v58, %v1910
  %v2112 = vmul.f32 %v59, %v1910
  %v2113 = vmul.f32 %v60, %v1915
  %v2114 = vmul.f32 %v61, %v1915
  %v2115 = vmul.f32 %v62, %v1920
  %v2116 = vmul.f32 %v63, %v1920
  %v2117 = vmul.f32 %v64, %v1925
  %v2118 = vmul.f32 %v65, %v1925
  %v2119 = vmul.f32 %v66, %v1930
  %v2120 = vmul.f32 %v67, %v1930
  %v2121 = vmul.f32 %v68, %v1935
  %v2122 = vmul.f32 %v69, %v1935
  %v2123 = vmul.f32 %v70, %v1940
  %v2124 = vmul.f32 %v71, %v1940
  %v2125 = vmul.f32 %v72, %v1945
  %v2126 = vmul.f32 %v73, %v1945
  %v2127 = vmul.f32 %v74, %v1950
  %v2128 = vmul.f32 %v75, %v1950
  %v2129 = vmul.f32 %v76, %v1955
  %v2130 = vmul.f32 %v77, %v1955
  %v2131 = vmul.f32 %v78, %v1960
  %v2132 = vmul.f32 %v79, %v1960
  %v2133 = vmul.f32 %v80, %v1965
  %v2134 = vmul.f32 %v81, %v1965
  %v2135 = vmul.f32 %v82, %v1970
  %v2136 = vmul.f32 %v83, %v1970
  %v2137 = vmul.f32 %v84, %v1975
  %v2138 = vmul.f32 %v85, %v1975
  %v2139 = vmul.f32 %v86, %v1980
  %v2140 = vmul.f32 %v87, %v1980
  %v2141 = vmul.f32 %v88, %v1985
  %v2142 = vmul.f32 %v89, %v1985
  %v2143 = vmul.f32 %v90, %v1990
  %v2144 = vmul.f32 %v91, %v1990
  %v2145 = vmul.f32 %v92, %v1995
  %v2146 = vmul.f32 %v93, %v1995
  %v2147 = vmul.f32 %v94, %v2000
  %v2148 = vmul.f32 %v95, %v2000
  %v2149 = vmul.f32 %v96, %v2005
  %v2150 = vmul.f32 %v97, %v2005
  %v2151 = vmul.f32 %v98, %v2010
  %v2152 = vmul.f32 %v99, %v2010
  %v2153 = vmul.f32 %v100, %v2015
  %v2154 = vmul.f32 %v101, %v2015
  %v2155 = vmul.f32 %v102, %v2020
  %v2156 = vmul.f32 %v103, %v2020
  %v2157 = vmul.f32 %v104, %v2025
  %v2158 = vmul.f32 %v105, %v2025
  %v2159 = vmul.f32 %v106, %v2030
  %v2160 = vmul.f32 %v107, %v2030
  %v2161 = vmul.f32 %v108, %v2035
  %v2162 = vmul.f32 %v109, %v2035
  %v2163 = vmul.f32 %v110, %v2040
  %v2164 = vmul.f32 %v111, %v2040
  %v2165 = vmul.f32 %v112, %v2045
  %v2166 = vmul.f32 %v113, %v2045
  %v2167 = vmul.f32 %v114, %v2050
  %v2168 = vmul.f32 %v115, %v2050
  %v2169 = vmul.f32 %v116, %v2055
  %v2170 = vmul.f32 %v117, %v2055
  %v2171 = vmul.f32 %v118, %v2060
  %v2172 = vmul.f32 %v119, %v2060
  %v2173 = vmul.f32 %v120, %v2065
  %v2174 = vmul.f32 %v121, %v2065
  %2176 = vset.pattern.permute.xlu0 0
  %2177 = vperm.xlu0 %2176, %v1743
  %v2178 = vpop.permute.xlu0 %2177
  %2181 = vset.pattern.permute.xlu0 0
  %2182 = vperm.xlu0 %2181, %v1744
  %v2183 = vpop.permute.xlu0 %2182
  %2186 = vset.pattern.permute.xlu0 0
  %2187 = vperm.xlu0 %2186, %v1745
  %v2188 = vpop.permute.xlu0 %2187
  %2191 = vset.pattern.permute.xlu0 0
  %2192 = vperm.xlu0 %2191, %v1746
  %v2193 = vpop.permute.xlu0 %2192
  %2196 = vset.pattern.permute.xlu0 0
  %2197 = vperm.xlu0 %2196, %v1747
  %v2198 = vpop.permute.xlu0 %2197
  %2201 = vset.pattern.permute.xlu0 0
  %2202 = vperm.xlu0 %2201, %v1748
  %v2203 = vpop.permute.xlu0 %2202
  %2206 = vset.pattern.permute.xlu0 0
  %2207 = vperm.xlu0 %2206, %v1749
  %v2208 = vpop.permute.xlu0 %2207
  %2211 = vset.pattern.permute.xlu0 0
  %2212 = vperm.xlu0 %2211, %v1750
  %v2213 = vpop.permute.xlu0 %2212
  %2216 = vset.pattern.permute.xlu0 0
  %2217 = vperm.xlu0 %2216, %v1751
  %v2218 = vpop.permute.xlu0 %2217
  %2221 = vset.pattern.permute.xlu0 0
  %2222 = vperm.xlu0 %2221, %v1752
  %v2223 = vpop.permute.xlu0 %2222
  %2226 = vset.pattern.permute.xlu0 0
  %2227 = vperm.xlu0 %2226, %v1753
  %v2228 = vpop.permute.xlu0 %2227
  %2231 = vset.pattern.permute.xlu0 0
  %2232 = vperm.xlu0 %2231, %v1754
  %v2233 = vpop.permute.xlu0 %2232
  %2236 = vset.pattern.permute.xlu0 0
  %2237 = vperm.xlu0 %2236, %v1755
  %v2238 = vpop.permute.xlu0 %2237
  %2241 = vset.pattern.permute.xlu0 0
  %2242 = vperm.xlu0 %2241, %v1756
  %v2243 = vpop.permute.xlu0 %2242
  %2246 = vset.pattern.permute.xlu0 0
  %2247 = vperm.xlu0 %2246, %v1757
  %v2248 = vpop.permute.xlu0 %2247
  %2251 = vset.pattern.permute.xlu0 0
  %2252 = vperm.xlu0 %2251, %v1758
  %v2253 = vpop.permute.xlu0 %2252
  %2256 = vset.pattern.permute.xlu0 0
  %2257 = vperm.xlu0 %2256, %v1759
  %v2258 = vpop.permute.xlu0 %2257
  %2261 = vset.pattern.permute.xlu0 0
  %2262 = vperm.xlu0 %2261, %v1760
  %v2263 = vpop.permute.xlu0 %2262
  %2266 = vset.pattern.permute.xlu0 0
  %2267 = vperm.xlu0 %2266, %v1761
  %v2268 = vpop.permute.xlu0 %2267
  %2271 = vset.pattern.permute.xlu0 0
  %2272 = vperm.xlu0 %2271, %v1762
  %v2273 = vpop.permute.xlu0 %2272
  %2276 = vset.pattern.permute.xlu0 0
  %2277 = vperm.xlu0 %2276, %v1763
  %v2278 = vpop.permute.xlu0 %2277
  %2281 = vset.pattern.permute.xlu0 0
  %2282 = vperm.xlu0 %2281, %v1764
  %v2283 = vpop.permute.xlu0 %2282
  %2286 = vset.pattern.permute.xlu0 0
  %2287 = vperm.xlu0 %2286, %v1765
  %v2288 = vpop.permute.xlu0 %2287
  %2291 = vset.pattern.permute.xlu0 0
  %2292 = vperm.xlu0 %2291, %v1766
  %v2293 = vpop.permute.xlu0 %2292
  %2296 = vset.pattern.permute.xlu0 0
  %2297 = vperm.xlu0 %2296, %v1767
  %v2298 = vpop.permute.xlu0 %2297
  %2301 = vset.pattern.permute.xlu0 0
  %2302 = vperm.xlu0 %2301, %v1768
  %v2303 = vpop.permute.xlu0 %2302
  %2306 = vset.pattern.permute.xlu0 0
  %2307 = vperm.xlu0 %2306, %v1769
  %v2308 = vpop.permute.xlu0 %2307
  %2311 = vset.pattern.permute.xlu0 0
  %2312 = vperm.xlu0 %2311, %v1770
  %v2313 = vpop.permute.xlu0 %2312
  %2316 = vset.pattern.permute.xlu0 0
  %2317 = vperm.xlu0 %2316, %v1771
  %v2318 = vpop.permute.xlu0 %2317
  %2321 = vset.pattern.permute.xlu0 0
  %2322 = vperm.xlu0 %2321, %v1772
  %v2323 = vpop.permute.xlu0 %2322
  %2326 = vset.pattern.permute.xlu0 0
  %2327 = vperm.xlu0 %2326, %v1773
  %v2328 = vpop.permute.xlu0 %2327
  %2331 = vset.pattern.permute.xlu0 0
  %2332 = vperm.xlu0 %2331, %v1774
  %v2333 = vpop.permute.xlu0 %2332
  %2336 = vset.pattern.permute.xlu0 0
  %2337 = vperm.xlu0 %2336, %v1775
  %v2338 = vpop.permute.xlu0 %2337
  %2341 = vset.pattern.permute.xlu0 0
  %2342 = vperm.xlu0 %2341, %v1776
  %v2343 = vpop.permute.xlu0 %2342
  %2346 = vset.pattern.permute.xlu0 0
  %2347 = vperm.xlu0 %2346, %v1777
  %v2348 = vpop.permute.xlu0 %2347
  %2351 = vset.pattern.permute.xlu0 0
  %2352 = vperm.xlu0 %2351, %v1778
  %v2353 = vpop.permute.xlu0 %2352
  %2356 = vset.pattern.permute.xlu0 0
  %2357 = vperm.xlu0 %2356, %v1779
  %v2358 = vpop.permute.xlu0 %2357
  %2361 = vset.pattern.permute.xlu0 0
  %2362 = vperm.xlu0 %2361, %v1780
  %v2363 = vpop.permute.xlu0 %2362
  %2366 = vset.pattern.permute.xlu0 0
  %2367 = vperm.xlu0 %2366, %v1781
  %v2368 = vpop.permute.xlu0 %2367
  %2371 = vset.pattern.permute.xlu0 0
  %2372 = vperm.xlu0 %2371, %v1782
  %v2373 = vpop.permute.xlu0 %2372
  %2376 = vset.pattern.permute.xlu0 0
  %2377 = vperm.xlu0 %2376, %v1783
  %v2378 = vpop.permute.xlu0 %2377
  %2381 = vset.pattern.permute.xlu0 0
  %2382 = vperm.xlu0 %2381, %v1784
  %v2383 = vpop.permute.xlu0 %2382
  %2386 = vset.pattern.permute.xlu0 0
  %2387 = vperm.xlu0 %2386, %v1785
  %v2388 = vpop.permute.xlu0 %2387
  %2391 = vset.pattern.permute.xlu0 0
  %2392 = vperm.xlu0 %2391, %v1786
  %v2393 = vpop.permute.xlu0 %2392
  %2396 = vset.pattern.permute.xlu0 0
  %2397 = vperm.xlu0 %2396, %v1787
  %v2398 = vpop.permute.xlu0 %2397
  %2401 = vset.pattern.permute.xlu0 0
  %2402 = vperm.xlu0 %2401, %v1788
  %v2403 = vpop.permute.xlu0 %2402
  %2406 = vset.pattern.permute.xlu0 0
  %2407 = vperm.xlu0 %2406, %v1789
  %v2408 = vpop.permute.xlu0 %2407
  %2411 = vset.pattern.permute.xlu0 0
  %2412 = vperm.xlu0 %2411, %v1790
  %v2413 = vpop.permute.xlu0 %2412
  %2416 = vset.pattern.permute.xlu0 0
  %2417 = vperm.xlu0 %2416, %v1791
  %v2418 = vpop.permute.xlu0 %2417
  %2421 = vset.pattern.permute.xlu0 0
  %2422 = vperm.xlu0 %2421, %v1792
  %v2423 = vpop.permute.xlu0 %2422
  %2426 = vset.pattern.permute.xlu0 0
  %2427 = vperm.xlu0 %2426, %v1793
  %v2428 = vpop.permute.xlu0 %2427
  %2431 = vset.pattern.permute.xlu0 0
  %2432 = vperm.xlu0 %2431, %v1794
  %v2433 = vpop.permute.xlu0 %2432
  %2436 = vset.pattern.permute.xlu0 0
  %2437 = vperm.xlu0 %2436, %v1795
  %v2438 = vpop.permute.xlu0 %2437
  %2441 = vset.pattern.permute.xlu0 0
  %2442 = vperm.xlu0 %2441, %v1796
  %v2443 = vpop.permute.xlu0 %2442
  %v2445 = vadd.f32 %v2067, %v2178
  %v2446 = vadd.f32 %v2068, %v2178
  %v2447 = vadd.f32 %v2069, %v2183
  %v2448 = vadd.f32 %v2070, %v2183
  %v2449 = vadd.f32 %v2071, %v2188
  %v2450 = vadd.f32 %v2072, %v2188
  %v2451 = vadd.f32 %v2073, %v2193
  %v2452 = vadd.f32 %v2074, %v2193
  %v2453 = vadd.f32 %v2075, %v2198
  %v2454 = vadd.f32 %v2076, %v2198
  %v2455 = vadd.f32 %v2077, %v2203
  %v2456 = vadd.f32 %v2078, %v2203
  %v2457 = vadd.f32 %v2079, %v2208
  %v2458 = vadd.f32 %v2080, %v2208
  %v2459 = vadd.f32 %v2081, %v2213
  %v2460 = vadd.f32 %v2082, %v2213
  %v2461 = vadd.f32 %v2083, %v2218
  %v2462 = vadd.f32 %v2084, %v2218
  %v2463 = vadd.f32 %v2085, %v2223
  %v2464 = vadd.f32 %v2086, %v2223
  %v2465 = vadd.f32 %v2087, %v2228
  %v2466 = vadd.f32 %v2088, %v2228
  %v2467 = vadd.f32 %v2089, %v2233
  %v2468 = vadd.f32 %v2090, %v2233
  %v2469 = vadd.f32 %v2091, %v2238
  %v2470 = vadd.f32 %v2092, %v2238
  %v2471 = vadd.f32 %v2093, %v2243
  %v2472 = vadd.f32 %v2094, %v2243
  %v2473 = vadd.f32 %v2095, %v2248
  %v2474 = vadd.f32 %v2096, %v2248
  %v2475 = vadd.f32 %v2097, %v2253
  %v2476 = vadd.f32 %v2098, %v2253
  %v2477 = vadd.f32 %v2099, %v2258
  %v2478 = vadd.f32 %v2100, %v2258
  %v2479 = vadd.f32 %v2101, %v2263
  %v2480 = vadd.f32 %v2102, %v2263
  %v2481 = vadd.f32 %v2103, %v2268
  %v2482 = vadd.f32 %v2104, %v2268
  %v2483 = vadd.f32 %v2105, %v2273
  %v2484 = vadd.f32 %v2106, %v2273
  %v2485 = vadd.f32 %v2107, %v2278
  %v2486 = vadd.f32 %v2108, %v2278
  %v2487 = vadd.f32 %v2109, %v2283
  %v2488 = vadd.f32 %v2110, %v2283
  %v2489 = vadd.f32 %v2111, %v2288
  %v2490 = vadd.f32 %v2112, %v2288
  %v2491 = vadd.f32 %v2113, %v2293
  %v2492 = vadd.f32 %v2114, %v2293
  %v2493 = vadd.f32 %v2115, %v2298
  %v2494 = vadd.f32 %v2116, %v2298
  %v2495 = vadd.f32 %v2117, %v2303
  %v2496 = vadd.f32 %v2118, %v2303
  %v2497 = vadd.f32 %v2119, %v2308
  %v2498 = vadd.f32 %v2120, %v2308
  %v2499 = vadd.f32 %v2121, %v2313
  %v2500 = vadd.f32 %v2122, %v2313
  %v2501 = vadd.f32 %v2123, %v2318
  %v2502 = vadd.f32 %v2124, %v2318
  %v2503 = vadd.f32 %v2125, %v2323
  %v2504 = vadd.f32 %v2126, %v2323
  %v2505 = vadd.f32 %v2127, %v2328
  %v2506 = vadd.f32 %v2128, %v2328
  %v2507 = vadd.f32 %v2129, %v2333
  %v2508 = vadd.f32 %v2130, %v2333
  %v2509 = vadd.f32 %v2131, %v2338
  %v2510 = vadd.f32 %v2132, %v2338
  %v2511 = vadd.f32 %v2133, %v2343
  %v2512 = vadd.f32 %v2134, %v2343
  %v2513 = vadd.f32 %v2135, %v2348
  %v2514 = vadd.f32 %v2136, %v2348
  %v2515 = vadd.f32 %v2137, %v2353
  %v2516 = vadd.f32 %v2138, %v2353
  %v2517 = vadd.f32 %v2139, %v2358
  %v2518 = vadd.f32 %v2140, %v2358
  %v2519 = vadd.f32 %v2141, %v2363
  %v2520 = vadd.f32 %v2142, %v2363
  %v2521 = vadd.f32 %v2143, %v2368
  %v2522 = vadd.f32 %v2144, %v2368
  %v2523 = vadd.f32 %v2145, %v2373
  %v2524 = vadd.f32 %v2146, %v2373
  %v2525 = vadd.f32 %v2147, %v2378
  %v2526 = vadd.f32 %v2148, %v2378
  %v2527 = vadd.f32 %v2149, %v2383
  %v2528 = vadd.f32 %v2150, %v2383
  %v2529 = vadd.f32 %v2151, %v2388
  %v2530 = vadd.f32 %v2152, %v2388
  %v2531 = vadd.f32 %v2153, %v2393
  %v2532 = vadd.f32 %v2154, %v2393
  %v2533 = vadd.f32 %v2155, %v2398
  %v2534 = vadd.f32 %v2156, %v2398
  %v2535 = vadd.f32 %v2157, %v2403
  %v2536 = vadd.f32 %v2158, %v2403
  %v2537 = vadd.f32 %v2159, %v2408
  %v2538 = vadd.f32 %v2160, %v2408
  %v2539 = vadd.f32 %v2161, %v2413
  %v2540 = vadd.f32 %v2162, %v2413
  %v2541 = vadd.f32 %v2163, %v2418
  %v2542 = vadd.f32 %v2164, %v2418
  %v2543 = vadd.f32 %v2165, %v2423
  %v2544 = vadd.f32 %v2166, %v2423
  %v2545 = vadd.f32 %v2167, %v2428
  %v2546 = vadd.f32 %v2168, %v2428
  %v2547 = vadd.f32 %v2169, %v2433
  %v2548 = vadd.f32 %v2170, %v2433
  %v2549 = vadd.f32 %v2171, %v2438
  %v2550 = vadd.f32 %v2172, %v2438
  %v2551 = vadd.f32 %v2173, %v2443
  %v2552 = vadd.f32 %v2174, %v2443
  %v2553 = vmax.f32 %v2445, 0.0
  %v2554 = vmax.f32 %v2446, 0.0
  %v2555 = vmax.f32 %v2447, 0.0
  %v2556 = vmax.f32 %v2448, 0.0
  %v2557 = vmax.f32 %v2449, 0.0
  %v2558 = vmax.f32 %v2450, 0.0
  %v2559 = vmax.f32 %v2451, 0.0
  %v2560 = vmax.f32 %v2452, 0.0
  %v2561 = vmax.f32 %v2453, 0.0
  %v2562 = vmax.f32 %v2454, 0.0
  %v2563 = vmax.f32 %v2455, 0.0
  %v2564 = vmax.f32 %v2456, 0.0
  %v2565 = vmax.f32 %v2457, 0.0
  %v2566 = vmax.f32 %v2458, 0.0
  %v2567 = vmax.f32 %v2459, 0.0
  %v2568 = vmax.f32 %v2460, 0.0
  %v2569 = vmax.f32 %v2461, 0.0
  %v2570 = vmax.f32 %v2462, 0.0
  %v2571 = vmax.f32 %v2463, 0.0
  %v2572 = vmax.f32 %v2464, 0.0
  %v2573 = vmax.f32 %v2465, 0.0
  %v2574 = vmax.f32 %v2466, 0.0
  %v2575 = vmax.f32 %v2467, 0.0
  %v2576 = vmax.f32 %v2468, 0.0
  %v2577 = vmax.f32 %v2469, 0.0
  %v2578 = vmax.f32 %v2470, 0.0
  %v2579 = vmax.f32 %v2471, 0.0
  %v2580 = vmax.f32 %v2472, 0.0
  %v2581 = vmax.f32 %v2473, 0.0
  %v2582 = vmax.f32 %v2474, 0.0
  %v2583 = vmax.f32 %v2475, 0.0
  %v2584 = vmax.f32 %v2476, 0.0
  %v2585 = vmax.f32 %v2477, 0.0
  %v2586 = vmax.f32 %v2478, 0.0
  %v2587 = vmax.f32 %v2479, 0.0
  %v2588 = vmax.f32 %v2480, 0.0
  %v2589 = vmax.f32 %v2481, 0.0
  %v2590 = vmax.f32 %v2482, 0.0
  %v2591 = vmax.f32 %v2483, 0.0
  %v2592 = vmax.f32 %v2484, 0.0
  %v2593 = vmax.f32 %v2485, 0.0
  %v2594 = vmax.f32 %v2486, 0.0
  %v2595 = vmax.f32 %v2487, 0.0
  %v2596 = vmax.f32 %v2488, 0.0
  %v2597 = vmax.f32 %v2489, 0.0
  %v2598 = vmax.f32 %v2490, 0.0
  %v2599 = vmax.f32 %v2491, 0.0
  %v2600 = vmax.f32 %v2492, 0.0
  %v2601 = vmax.f32 %v2493, 0.0
  %v2602 = vmax.f32 %v2494, 0.0
  %v2603 = vmax.f32 %v2495, 0.0
  %v2604 = vmax.f32 %v2496, 0.0
  %v2605 = vmax.f32 %v2497, 0.0
  %v2606 = vmax.f32 %v2498, 0.0
  %v2607 = vmax.f32 %v2499, 0.0
  %v2608 = vmax.f32 %v2500, 0.0
  %v2609 = vmax.f32 %v2501, 0.0
  %v2610 = vmax.f32 %v2502, 0.0
  %v2611 = vmax.f32 %v2503, 0.0
  %v2612 = vmax.f32 %v2504, 0.0
  %v2613 = vmax.f32 %v2505, 0.0
  %v2614 = vmax.f32 %v2506, 0.0
  %v2615 = vmax.f32 %v2507, 0.0
  %v2616 = vmax.f32 %v2508, 0.0
  %v2617 = vmax.f32 %v2509, 0.0
  %v2618 = vmax.f32 %v2510, 0.0
  %v2619 = vmax.f32 %v2511, 0.0
  %v2620 = vmax.f32 %v2512, 0.0
  %v2621 = vmax.f32 %v2513, 0.0
  %v2622 = vmax.f32 %v2514, 0.0
  %v2623 = vmax.f32 %v2515, 0.0
  %v2624 = vmax.f32 %v2516, 0.0
  %v2625 = vmax.f32 %v2517, 0.0
  %v2626 = vmax.f32 %v2518, 0.0
  %v2627 = vmax.f32 %v2519, 0.0
  %v2628 = vmax.f32 %v2520, 0.0
  %v2629 = vmax.f32 %v2521, 0.0
  %v2630 = vmax.f32 %v2522, 0.0
  %v2631 = vmax.f32 %v2523, 0.0
  %v2632 = vmax.f32 %v2524, 0.0
  %v2633 = vmax.f32 %v2525, 0.0
  %v2634 = vmax.f32 %v2526, 0.0
  %v2635 = vmax.f32 %v2527, 0.0
  %v2636 = vmax.f32 %v2528, 0.0
  %v2637 = vmax.f32 %v2529, 0.0
  %v2638 = vmax.f32 %v2530, 0.0
  %v2639 = vmax.f32 %v2531, 0.0
  %v2640 = vmax.f32 %v2532, 0.0
  %v2641 = vmax.f32 %v2533, 0.0
  %v2642 = vmax.f32 %v2534, 0.0
  %v2643 = vmax.f32 %v2535, 0.0
  %v2644 = vmax.f32 %v2536, 0.0
  %v2645 = vmax.f32 %v2537, 0.0
  %v2646 = vmax.f32 %v2538, 0.0
  %v2647 = vmax.f32 %v2539, 0.0
  %v2648 = vmax.f32 %v2540, 0.0
  %v2649 = vmax.f32 %v2541, 0.0
  %v2650 = vmax.f32 %v2542, 0.0
  %v2651 = vmax.f32 %v2543, 0.0
  %v2652 = vmax.f32 %v2544, 0.0
  %v2653 = vmax.f32 %v2545, 0.0
  %v2654 = vmax.f32 %v2546, 0.0
  %v2655 = vmax.f32 %v2547, 0.0
  %v2656 = vmax.f32 %v2548, 0.0
  %v2657 = vmax.f32 %v2549, 0.0
  %v2658 = vmax.f32 %v2550, 0.0
  %v2659 = vmax.f32 %v2551, 0.0
  %v2660 = vmax.f32 %v2552, 0.0
  %2661 = vst [vmem:[%s3] sm:$0xff] %v2553
  %2662 = vst.msk [vmem:[%s3 + $0x8] sm:$0xff] %vm122, %v2554
  %2663 = vst [vmem:[%s3 + $0x10] sm:$0xff] %v2555
  %2664 = vst.msk [vmem:[%s3 + $0x18] sm:$0xff] %vm122, %v2556
  %2665 = vst [vmem:[%s3 + $0x20] sm:$0xff] %v2557
  %2666 = vst.msk [vmem:[%s3 + $0x28] sm:$0xff] %vm122, %v2558
  %2667 = vst [vmem:[%s3 + $0x30] sm:$0xff] %v2559
  %2668 = vst.msk [vmem:[%s3 + $0x38] sm:$0xff] %vm122, %v2560
  %2669 = vst [vmem:[%s3 + $0x40] sm:$0xff] %v2561
  %2670 = vst.msk [vmem:[%s3 + $0x48] sm:$0xff] %vm122, %v2562
  %2671 = vst [vmem:[%s3 + $0x50] sm:$0xff] %v2563
  %2672 = vst.msk [vmem:[%s3 + $0x58] sm:$0xff] %vm122, %v2564
  %2673 = vst [vmem:[%s3 + $0x60] sm:$0xff] %v2565
  %2674 = vst.msk [vmem:[%s3 + $0x68] sm:$0xff] %vm122, %v2566
  %2675 = vst [vmem:[%s3 + $0x70] sm:$0xff] %v2567
  %2676 = vst.msk [vmem:[%s3 + $0x78] sm:$0xff] %vm122, %v2568
  %2677 = vst [vmem:[%s3 + $0x80] sm:$0xff] %v2569
  %2678 = vst.msk [vmem:[%s3 + $0x88] sm:$0xff] %vm122, %v2570
  %2679 = vst [vmem:[%s3 + $0x90] sm:$0xff] %v2571
  %2680 = vst.msk [vmem:[%s3 + $0x98] sm:$0xff] %vm122, %v2572
  %2681 = vst [vmem:[%s3 + $0xa0] sm:$0xff] %v2573
  %2682 = vst.msk [vmem:[%s3 + $0xa8] sm:$0xff] %vm122, %v2574
  %2683 = vst [vmem:[%s3 + $0xb0] sm:$0xff] %v2575
  %2684 = vst.msk [vmem:[%s3 + $0xb8] sm:$0xff] %vm122, %v2576
  %2685 = vst [vmem:[%s3 + $0xc0] sm:$0xff] %v2577
  %2686 = vst.msk [vmem:[%s3 + $0xc8] sm:$0xff] %vm122, %v2578
  %2687 = vst [vmem:[%s3 + $0xd0] sm:$0xff] %v2579
  %2688 = vst.msk [vmem:[%s3 + $0xd8] sm:$0xff] %vm122, %v2580
  %2689 = vst [vmem:[%s3 + $0xe0] sm:$0xff] %v2581
  %2690 = vst.msk [vmem:[%s3 + $0xe8] sm:$0xff] %vm122, %v2582
  %2691 = vst [vmem:[%s3 + $0xf0] sm:$0xff] %v2583
  %2692 = vst.msk [vmem:[%s3 + $0xf8] sm:$0xff] %vm122, %v2584
  %2693 = vst [vmem:[%s3 + $0x100] sm:$0xff] %v2585
  %2694 = vst.msk [vmem:[%s3 + $0x108] sm:$0xff] %vm122, %v2586
  %2695 = vst [vmem:[%s3 + $0x110] sm:$0xff] %v2587
  %2696 = vst.msk [vmem:[%s3 + $0x118] sm:$0xff] %vm122, %v2588
  %2697 = vst [vmem:[%s3 + $0x120] sm:$0xff] %v2589
  %2698 = vst.msk [vmem:[%s3 + $0x128] sm:$0xff] %vm122, %v2590
  %2699 = vst [vmem:[%s3 + $0x130] sm:$0xff] %v2591
  %2700 = vst.msk [vmem:[%s3 + $0x138] sm:$0xff] %vm122, %v2592
  %2701 = vst [vmem:[%s3 + $0x140] sm:$0xff] %v2593
  %2702 = vst.msk [vmem:[%s3 + $0x148] sm:$0xff] %vm122, %v2594
  %2703 = vst [vmem:[%s3 + $0x150] sm:$0xff] %v2595
  %2704 = vst.msk [vmem:[%s3 + $0x158] sm:$0xff] %vm122, %v2596
  %2705 = vst [vmem:[%s3 + $0x160] sm:$0xff] %v2597
  %2706 = vst.msk [vmem:[%s3 + $0x168] sm:$0xff] %vm122, %v2598
  %2707 = vst [vmem:[%s3 + $0x170] sm:$0xff] %v2599
  %2708 = vst.msk [vmem:[%s3 + $0x178] sm:$0xff] %vm122, %v2600
  %2709 = vst [vmem:[%s3 + $0x180] sm:$0xff] %v2601
  %2710 = vst.msk [vmem:[%s3 + $0x188] sm:$0xff] %vm122, %v2602
  %2711 = vst [vmem:[%s3 + $0x190] sm:$0xff] %v2603
  %2712 = vst.msk [vmem:[%s3 + $0x198] sm:$0xff] %vm122, %v2604
  %2713 = vst [vmem:[%s3 + $0x1a0] sm:$0xff] %v2605
  %2714 = vst.msk [vmem:[%s3 + $0x1a8] sm:$0xff] %vm122, %v2606
  %2715 = vst [vmem:[%s3 + $0x1b0] sm:$0xff] %v2607
  %2716 = vst.msk [vmem:[%s3 + $0x1b8] sm:$0xff] %vm122, %v2608
  %2717 = vst [vmem:[%s3 + $0x1c0] sm:$0xff] %v2609
  %2718 = vst.msk [vmem:[%s3 + $0x1c8] sm:$0xff] %vm122, %v2610
  %2719 = vst [vmem:[%s3 + $0x1d0] sm:$0xff] %v2611
  %2720 = vst.msk [vmem:[%s3 + $0x1d8] sm:$0xff] %vm122, %v2612
  %2721 = vst [vmem:[%s3 + $0x1e0] sm:$0xff] %v2613
  %2722 = vst.msk [vmem:[%s3 + $0x1e8] sm:$0xff] %vm122, %v2614
  %2723 = vst [vmem:[%s3 + $0x1f0] sm:$0xff] %v2615
  %2724 = vst.msk [vmem:[%s3 + $0x1f8] sm:$0xff] %vm122, %v2616
  %2725 = vst [vmem:[%s3 + $0x200] sm:$0xff] %v2617
  %2726 = vst.msk [vmem:[%s3 + $0x208] sm:$0xff] %vm122, %v2618
  %2727 = vst [vmem:[%s3 + $0x210] sm:$0xff] %v2619
  %2728 = vst.msk [vmem:[%s3 + $0x218] sm:$0xff] %vm122, %v2620
  %2729 = vst [vmem:[%s3 + $0x220] sm:$0xff] %v2621
  %2730 = vst.msk [vmem:[%s3 + $0x228] sm:$0xff] %vm122, %v2622
  %2731 = vst [vmem:[%s3 + $0x230] sm:$0xff] %v2623
  %2732 = vst.msk [vmem:[%s3 + $0x238] sm:$0xff] %vm122, %v2624
  %2733 = vst [vmem:[%s3 + $0x240] sm:$0xff] %v2625
  %2734 = vst.msk [vmem:[%s3 + $0x248] sm:$0xff] %vm122, %v2626
  %2735 = vst [vmem:[%s3 + $0x250] sm:$0xff] %v2627
  %2736 = vst.msk [vmem:[%s3 + $0x258] sm:$0xff] %vm122, %v2628
  %2737 = vst [vmem:[%s3 + $0x260] sm:$0xff] %v2629
  %2738 = vst.msk [vmem:[%s3 + $0x268] sm:$0xff] %vm122, %v2630
  %2739 = vst [vmem:[%s3 + $0x270] sm:$0xff] %v2631
  %2740 = vst.msk [vmem:[%s3 + $0x278] sm:$0xff] %vm122, %v2632
  %2741 = vst [vmem:[%s3 + $0x280] sm:$0xff] %v2633
  %2742 = vst.msk [vmem:[%s3 + $0x288] sm:$0xff] %vm122, %v2634
  %2743 = vst [vmem:[%s3 + $0x290] sm:$0xff] %v2635
  %2744 = vst.msk [vmem:[%s3 + $0x298] sm:$0xff] %vm122, %v2636
  %2745 = vst [vmem:[%s3 + $0x2a0] sm:$0xff] %v2637
  %2746 = vst.msk [vmem:[%s3 + $0x2a8] sm:$0xff] %vm122, %v2638
  %2747 = vst [vmem:[%s3 + $0x2b0] sm:$0xff] %v2639
  %2748 = vst.msk [vmem:[%s3 + $0x2b8] sm:$0xff] %vm122, %v2640
  %2749 = vst [vmem:[%s3 + $0x2c0] sm:$0xff] %v2641
  %2750 = vst.msk [vmem:[%s3 + $0x2c8] sm:$0xff] %vm122, %v2642
  %2751 = vst [vmem:[%s3 + $0x2d0] sm:$0xff] %v2643
  %2752 = vst.msk [vmem:[%s3 + $0x2d8] sm:$0xff] %vm122, %v2644
  %2753 = vst [vmem:[%s3 + $0x2e0] sm:$0xff] %v2645
  %2754 = vst.msk [vmem:[%s3 + $0x2e8] sm:$0xff] %vm122, %v2646
  %2755 = vst [vmem:[%s3 + $0x2f0] sm:$0xff] %v2647
  %2756 = vst.msk [vmem:[%s3 + $0x2f8] sm:$0xff] %vm122, %v2648
  %2757 = vst [vmem:[%s3 + $0x300] sm:$0xff] %v2649
  %2758 = vst.msk [vmem:[%s3 + $0x308] sm:$0xff] %vm122, %v2650
  %2759 = vst [vmem:[%s3 + $0x310] sm:$0xff] %v2651
  %2760 = vst.msk [vmem:[%s3 + $0x318] sm:$0xff] %vm122, %v2652
  %2761 = vst [vmem:[%s3 + $0x320] sm:$0xff] %v2653
  %2762 = vst.msk [vmem:[%s3 + $0x328] sm:$0xff] %vm122, %v2654
  %2763 = vst [vmem:[%s3 + $0x330] sm:$0xff] %v2655
  %2764 = vst.msk [vmem:[%s3 + $0x338] sm:$0xff] %vm122, %v2656
  %2765 = vst [vmem:[%s3 + $0x340] sm:$0xff] %v2657
  %2766 = vst.msk [vmem:[%s3 + $0x348] sm:$0xff] %vm122, %v2658
  %2767 = vst [vmem:[%s3 + $0x350] sm:$0xff] %v2659
  %2768 = vst.msk [vmem:[%s3 + $0x358] sm:$0xff] %vm122, %v2660
  // Predicated region
  $region14: #{tpu_custom_call.1} parent=0 // pred_check
    _
  $region15: #{tpu_custom_call.1} parent=0 // pred_check_branch
    %2770 = sbr.rel (0) target = $region17
  $region16: #{tpu_custom_call.1} parent=0 // pred_region
    _
  $region17: #{tpu_custom_call.1} parent=0 // pred_fallthru
    _
  // Predicated region
  $region18: #{tpu_custom_call.1} parent=0 // pred_check
    _
  $region19: #{tpu_custom_call.1} parent=0 // pred_check_branch
    %2772 = sbr.rel (0) target = $region21
  $region20: #{tpu_custom_call.1} parent=0 // pred_region
    _
  $region21: #{tpu_custom_call.1} parent=0 // pred_fallthru
    _

</llo_original>
